<compile_context>
chip_gen: v7x
topology: tpu7x:2x2x1
jax: 0.10.0
libtpu: 0.0.40
codegen_flags: <defaults>
</compile_context>

<pallas_src>
import functools

import jax
import jax.numpy as jnp
from jax.experimental import pallas as pl
from jax.experimental.pallas import tpu as pltpu

EPS = 1e-5


def residual_block_kernel(x_ref, wb1_ref, wb2_ref, g_ref, gt_ref,
                          g1_ref, bt1_ref, g2_ref, bt2_ref, o_ref,
                          *, img_h, inv_count):
    f32 = jnp.float32
    bf16 = jnp.bfloat16
    x = x_ref[...]                                     # (N*H, W*C) lane-dense, f32
    rows = x.shape[0]

    # Row-boundary masks for the +-1 kh taps (also kill the circular wrap of roll).
    row = jax.lax.broadcasted_iota(jnp.int32, x.shape, 0)
    has_up = (row % img_h) != 0                        # row r-1 is in the same image
    has_dn = (row % img_h) != (img_h - 1)              # row r+1 is in the same image
    ones_row = jnp.ones((1, rows), f32)

    def conv_bn(t, wb_ref, gamma, beta, relu):
        # 3x3 conv as ONE bf16 MXU matmul (K = 3*W*C): kh taps via XLU row
        # rolls + boundary mask, kw taps + channel contraction folded into the
        # banded weight stack built once on the host.
        up = jnp.where(has_up, pltpu.roll(t, shift=1, axis=0), 0.0)          # t[r-1]
        dn = jnp.where(has_dn, pltpu.roll(t, shift=rows - 1, axis=0), 0.0)   # t[r+1]
        lhs = jnp.concatenate([up, t, dn], axis=1).astype(bf16)              # (rows, 3*W*C)
        acc = jnp.dot(lhs, wb_ref[...], preferred_element_type=f32)          # (rows, W*C) f32

        # Training-mode BatchNorm folded into one per-channel scale/shift.
        # Row reduction (ones-row) and the pixel->channel gather / channel->lane
        # scatter run on the MXU; the paired tiny matmuls are fused (2 rows).
        lane_sum = jnp.dot(ones_row, acc, preferred_element_type=f32)        # (1, W*C)
        lane_sq = jnp.dot(ones_row, acc * acc, preferred_element_type=f32)   # (1, W*C)
        stats = jnp.dot(jnp.concatenate([lane_sum, lane_sq], axis=0),
                        g_ref[...], preferred_element_type=f32) * inv_count  # (2, C)
        mean = stats[0:1]                               # (1, C)
        var = stats[1:2] - mean * mean                  # biased batch variance
        scale = gamma * jax.lax.rsqrt(var + EPS)        # (1, C)
        shift = beta - mean * scale                     # (1, C)
        ss = jnp.dot(jnp.concatenate([scale, shift], axis=0),
                     gt_ref[...], preferred_element_type=f32)                # (2, W*C)
        y = acc * ss[0:1] + ss[1:2]                     # one FMA pass
        return jnp.maximum(y, 0.0) if relu else y

    y = conv_bn(x, wb1_ref, g1_ref[...], bt1_ref[...], relu=True)
    y = conv_bn(y, wb2_ref, g2_ref[...], bt2_ref[...], relu=False)
    o_ref[...] = jnp.maximum(y + x, 0.0)                # residual + ReLU, lane-dense store


def _banded_weights(w_hwio, width):
    """(3, 3, C, C) HWIO -> (3*W*C, W*C): per-kh banded matrices, stacked.

    band[kh][wi*C + ci, wo*C + co] = w[kh, wi - wo + 1, ci, co] if |wi-wo| <= 1.
    The vertical stack [band0; band1; band2] pairs with lanes [up | t | dn].
    """
    c = w_hwio.shape[-1]
    dw = jnp.arange(width)[:, None] - jnp.arange(width)[None, :] + 1       # wi - wo + 1
    valid = ((dw >= 0) & (dw <= 2)).astype(w_hwio.dtype)
    blocks = w_hwio[:, jnp.clip(dw, 0, 2)] * valid[None, :, :, None, None]  # (3, W, W, C, C)
    banded = blocks.transpose(0, 1, 3, 2, 4).reshape(3, width * c, width * c)
    return banded.reshape(3 * width * c, width * c)


def residual_block(x_nchw, params):
    """PyTorch-compatible wrapper: NCHW in/out, lane-dense (N*H, W*C) kernel inside."""
    x = jnp.transpose(x_nchw, (0, 2, 3, 1)).astype(jnp.float32)    # NHWC
    n, h, w, c = x.shape
    rows, lanes = n * h, w * c
    # TODO(synk): general W*C (padding / different repack) — the lane-dense
    # layout below assumes the trailing axis is exactly one full lane width.
    assert lanes == 128, "kernel assumes W*C == 128"
    x2d = x.reshape(rows, lanes)                                   # lane-dense 2-D view

    # bf16 conv weights (f32 accumulation happens in-kernel).
    wb1 = _banded_weights(params["w1"], w).astype(jnp.bfloat16)    # (3*W*C, W*C)
    wb2 = _banded_weights(params["w2"], w).astype(jnp.bfloat16)
    # channel gather / scatter matrices mapping lane w*C+c <-> channel c (f32 stat path)
    gmat = (jnp.arange(lanes)[:, None] % c ==
            jnp.arange(c)[None, :]).astype(jnp.float32)            # (W*C, C)
    gmat_t = jnp.transpose(gmat)                                   # (C, W*C)
    # params["b1"] / params["b2"] are intentionally NOT passed: the conv bias is
    # exactly cancelled by the training-mode BatchNorm mean subtraction.

    vmem = pl.BlockSpec(memory_space=pltpu.MemorySpace.VMEM)
    kernel = functools.partial(residual_block_kernel,
                               img_h=h, inv_count=1.0 / (n * h * w))
    out2d = pl.pallas_call(
        kernel,
        out_shape=jax.ShapeDtypeStruct((rows, lanes), jnp.float32),
        in_specs=[vmem] * 9,
        out_specs=vmem,
    )(x2d, wb1, wb2, gmat, gmat_t,
      params["g1"], params["beta1"], params["g2"], params["beta2"])

    return jnp.transpose(out2d.reshape(n, h, w, c), (0, 3, 1, 2))  # back to NCHW


def residual_block_reference(x_nchw, params, conv_dtype=jnp.float32):
    """Pure-JAX reference (same math as the PyTorch module in training mode).

    conv_dtype lets us build both an exact-f32 reference and a reference whose
    conv operands match the kernel's bf16 MXU precision.
    """
    x = jnp.transpose(x_nchw, (0, 2, 3, 1)).astype(jnp.float32)

    def conv(t, wgt, b):
        y = jax.lax.conv_general_dilated(
            t.astype(conv_dtype), wgt.astype(conv_dtype),
            window_strides=(1, 1), padding="SAME",
            dimension_numbers=("NHWC", "HWIO", "NHWC"),
            preferred_element_type=jnp.float32,
            precision=jax.lax.Precision.HIGHEST)
        return y + b.reshape(1, 1, 1, -1)

    def bn(y, g, be):
        mean = jnp.mean(y, axis=(0, 1, 2), keepdims=True)
        var = jnp.mean((y - mean) ** 2, axis=(0, 1, 2), keepdims=True)
        return ((y - mean) * jax.lax.rsqrt(var + EPS)
                * g.reshape(1, 1, 1, -1) + be.reshape(1, 1, 1, -1))

    t = jax.nn.relu(bn(conv(x, params["w1"], params["b1"]),
                       params["g1"], params["beta1"]))
    t = bn(conv(t, params["w2"], params["b2"]), params["g2"], params["beta2"])
    return jnp.transpose(jax.nn.relu(t + x), (0, 3, 1, 2))


if __name__ == "__main__":
    # Small shapes (NCHW like PyTorch): batch=2, num_filters=8, spatial=16x16.
    # W * C = 128, so the kernel's trailing axis is exactly one full lane width.
    N, C, H, W = 2, 8, 16, 16
    keys = jax.random.split(jax.random.PRNGKey(0), 8)
    x = jax.random.normal(keys[0], (N, C, H, W), jnp.float32)

    params = {
        "w1": 0.1 * jax.random.normal(keys[1], (3, 3, C, C), jnp.float32),
        "b1": 0.05 * jax.random.normal(keys[2], (1, C), jnp.float32),
        "g1": 1.0 + 0.1 * jax.random.normal(keys[3], (1, C), jnp.float32),
        "beta1": 0.1 * jax.random.normal(keys[4], (1, C), jnp.float32),
        "w2": 0.1 * jax.random.normal(keys[5], (3, 3, C, C), jnp.float32),
        "b2": 0.05 * jax.random.normal(keys[6], (1, C), jnp.float32),
        "g2": 1.0 + 0.1 * jax.random.normal(keys[7], (1, C), jnp.float32),
        "beta2": jnp.zeros((1, C), jnp.float32),
    }

    out = jax.block_until_ready(residual_block(x, params))
    ref_bf16 = residual_block_reference(x, params, conv_dtype=jnp.bfloat16)
    ref_f32 = residual_block_reference(x, params, conv_dtype=jnp.float32)

    assert out.shape == (N, C, H, W)
    assert out.dtype == jnp.float32
    # Tight check against a reference with matching (bf16-operand) conv precision.
    assert jnp.allclose(out, ref_bf16, atol=1e-2, rtol=1e-2)
    # Loose check against the exact-f32 reference (bf16 MXU operands cost ~1e-2).
    assert jnp.allclose(out, ref_f32, atol=5e-2, rtol=5e-2)
    print("KERNEL_OK")
</pallas_src>

<mosaic_0001>
module attributes {stable_mosaic.version = 11 : i64} {
  func.func @residual_block_kernel(%arg0: memref<32x128xf32, #tpu.memory_space<vmem>>, %arg1: memref<384x128xbf16, #tpu.memory_space<vmem>>, %arg2: memref<384x128xbf16, #tpu.memory_space<vmem>>, %arg3: memref<128x8xf32, #tpu.memory_space<vmem>>, %arg4: memref<8x128xf32, #tpu.memory_space<vmem>>, %arg5: memref<1x8xf32, #tpu.memory_space<vmem>>, %arg6: memref<1x8xf32, #tpu.memory_space<vmem>>, %arg7: memref<1x8xf32, #tpu.memory_space<vmem>>, %arg8: memref<1x8xf32, #tpu.memory_space<vmem>>, %arg9: memref<32x128xf32, #tpu.memory_space<vmem>>) attributes {dimension_semantics = [], scalar_prefetch = 0 : i64, scratch_operands = 0 : i64, tpu.core_type = #tpu.core_type<tc>} {
    %c0 = arith.constant 0 : index
    %c0_0 = arith.constant 0 : index
    %0 = vector.load %arg0[%c0, %c0_0] : memref<32x128xf32, #tpu.memory_space<vmem>>, vector<32x128xf32>
    %1 = tpu.iota {dimensions = array<i32: 0>} : vector<32x128xi32>
    %c16_i32 = arith.constant 16 : i32
    %c0_i32 = arith.constant 0 : i32
    %2 = arith.cmpi eq, %c16_i32, %c0_i32 : i32
    %c1_i32 = arith.constant 1 : i32
    %3 = arith.select %2, %c1_i32, %c16_i32 : i32
    %4 = vector.broadcast %3 : i32 to vector<32x128xi32>
    %5 = arith.remsi %1, %4 : vector<32x128xi32>
    %c0_i32_1 = arith.constant 0 : i32
    %6 = vector.broadcast %c0_i32_1 : i32 to vector<32x128xi32>
    %7 = arith.cmpi ne, %5, %6 : vector<32x128xi32>
    %c0_i32_2 = arith.constant 0 : i32
    %8 = vector.broadcast %c0_i32_2 : i32 to vector<32x128xi32>
    %9 = arith.cmpi slt, %5, %8 : vector<32x128xi32>
    %c0_i32_3 = arith.constant 0 : i32
    %10 = arith.cmpi slt, %3, %c0_i32_3 : i32
    %11 = vector.broadcast %10 : i1 to vector<32x128xi1>
    %12 = vector.broadcast %11 : vector<32x128xi1> to vector<32x128xi1>
    %13 = arith.xori %9, %12 : vector<32x128xi1>
    %14 = arith.andi %13, %7 : vector<32x128xi1>
    %15 = vector.broadcast %3 : i32 to vector<32x128xi32>
    %16 = arith.addi %5, %15 : vector<32x128xi32>
    %17 = arith.select %14, %16, %5 : vector<32x128xi1>, vector<32x128xi32>
    %c0_i32_4 = arith.constant 0 : i32
    %18 = vector.broadcast %c0_i32_4 : i32 to vector<32x128xi32>
    %19 = arith.cmpi ne, %17, %18 : vector<32x128xi32>
    %c16_i32_5 = arith.constant 16 : i32
    %c0_i32_6 = arith.constant 0 : i32
    %20 = arith.cmpi eq, %c16_i32_5, %c0_i32_6 : i32
    %c1_i32_7 = arith.constant 1 : i32
    %21 = arith.select %20, %c1_i32_7, %c16_i32_5 : i32
    %22 = vector.broadcast %21 : i32 to vector<32x128xi32>
    %23 = arith.remsi %1, %22 : vector<32x128xi32>
    %c0_i32_8 = arith.constant 0 : i32
    %24 = vector.broadcast %c0_i32_8 : i32 to vector<32x128xi32>
    %25 = arith.cmpi ne, %23, %24 : vector<32x128xi32>
    %c0_i32_9 = arith.constant 0 : i32
    %26 = vector.broadcast %c0_i32_9 : i32 to vector<32x128xi32>
    %27 = arith.cmpi slt, %23, %26 : vector<32x128xi32>
    %c0_i32_10 = arith.constant 0 : i32
    %28 = arith.cmpi slt, %21, %c0_i32_10 : i32
    %29 = vector.broadcast %28 : i1 to vector<32x128xi1>
    %30 = vector.broadcast %29 : vector<32x128xi1> to vector<32x128xi1>
    %31 = arith.xori %27, %30 : vector<32x128xi1>
    %32 = arith.andi %31, %25 : vector<32x128xi1>
    %33 = vector.broadcast %21 : i32 to vector<32x128xi32>
    %34 = arith.addi %23, %33 : vector<32x128xi32>
    %35 = arith.select %32, %34, %23 : vector<32x128xi1>, vector<32x128xi32>
    %c15_i32 = arith.constant 15 : i32
    %36 = vector.broadcast %c15_i32 : i32 to vector<32x128xi32>
    %37 = arith.cmpi ne, %35, %36 : vector<32x128xi32>
    %cst = arith.constant 1.000000e+00 : f32
    %38 = vector.broadcast %cst : f32 to vector<1x32xf32>
    %c0_11 = arith.constant 0 : index
    %c0_12 = arith.constant 0 : index
    %39 = vector.load %arg5[%c0_11, %c0_12] : memref<1x8xf32, #tpu.memory_space<vmem>>, vector<1x8xf32>
    %c0_13 = arith.constant 0 : index
    %c0_14 = arith.constant 0 : index
    %40 = vector.load %arg6[%c0_13, %c0_14] : memref<1x8xf32, #tpu.memory_space<vmem>>, vector<1x8xf32>
    %c1_i32_15 = arith.constant 1 : i32
    %41 = tpu.dynamic_rotate %0 by %c1_i32_15 dim 0 : vector<32x128xf32>, i32 -> vector<32x128xf32>
    %cst_16 = arith.constant 0.000000e+00 : f32
    %42 = vector.broadcast %cst_16 : f32 to vector<32x128xf32>
    %43 = arith.select %19, %41, %42 : vector<32x128xi1>, vector<32x128xf32>
    %c31_i32 = arith.constant 31 : i32
    %44 = tpu.dynamic_rotate %0 by %c31_i32 dim 0 : vector<32x128xf32>, i32 -> vector<32x128xf32>
    %cst_17 = arith.constant 0.000000e+00 : f32
    %45 = vector.broadcast %cst_17 : f32 to vector<32x128xf32>
    %46 = arith.select %37, %44, %45 : vector<32x128xi1>, vector<32x128xf32>
    %47 = tpu.concatenate %43, %0, %46 in 1 : vector<32x128xf32>, vector<32x128xf32>, vector<32x128xf32> -> vector<32x384xf32>
    %48 = arith.truncf %47 : vector<32x384xf32> to vector<32x384xbf16>
    %c0_18 = arith.constant 0 : index
    %c0_19 = arith.constant 0 : index
    %49 = vector.load %arg1[%c0_18, %c0_19] : memref<384x128xbf16, #tpu.memory_space<vmem>>, vector<384x128xbf16>
    %cst_20 = arith.constant dense<0.000000e+00> : vector<32x128xf32>
    %50 = tpu.matmul %48, %49, %cst_20 {dimension_numbers = #tpu.dot_dimension_numbers<[1], [0], [0], [1], [0, 0, 1, 1], [], []>} : vector<32x384xbf16>, vector<384x128xbf16>, vector<32x128xf32> -> vector<32x128xf32>
    %cst_21 = arith.constant dense<0.000000e+00> : vector<1x128xf32>
    %51 = tpu.matmul %38, %50, %cst_21 {dimension_numbers = #tpu.dot_dimension_numbers<[1], [0], [0], [1], [0, 0, 1, 1], [], []>} : vector<1x32xf32>, vector<32x128xf32>, vector<1x128xf32> -> vector<1x128xf32>
    %52 = arith.mulf %50, %50 : vector<32x128xf32>
    %cst_22 = arith.constant dense<0.000000e+00> : vector<1x128xf32>
    %53 = tpu.matmul %38, %52, %cst_22 {dimension_numbers = #tpu.dot_dimension_numbers<[1], [0], [0], [1], [0, 0, 1, 1], [], []>} : vector<1x32xf32>, vector<32x128xf32>, vector<1x128xf32> -> vector<1x128xf32>
    %54 = tpu.concatenate %51, %53 in 0 : vector<1x128xf32>, vector<1x128xf32> -> vector<2x128xf32>
    %c0_23 = arith.constant 0 : index
    %c0_24 = arith.constant 0 : index
    %55 = vector.load %arg3[%c0_23, %c0_24] : memref<128x8xf32, #tpu.memory_space<vmem>>, vector<128x8xf32>
    %cst_25 = arith.constant dense<0.000000e+00> : vector<2x8xf32>
    %56 = tpu.matmul %54, %55, %cst_25 {dimension_numbers = #tpu.dot_dimension_numbers<[1], [0], [0], [1], [0, 0, 1, 1], [], []>} : vector<2x128xf32>, vector<128x8xf32>, vector<2x8xf32> -> vector<2x8xf32>
    %cst_26 = arith.constant 0.001953125 : f32
    %57 = vector.broadcast %cst_26 : f32 to vector<2x8xf32>
    %58 = arith.mulf %56, %57 : vector<2x8xf32>
    %59 = vector.extract_strided_slice %58 {offsets = [0, 0], sizes = [1, 8], strides = [1, 1]} : vector<2x8xf32> to vector<1x8xf32>
    %60 = vector.extract_strided_slice %58 {offsets = [1, 0], sizes = [1, 8], strides = [1, 1]} : vector<2x8xf32> to vector<1x8xf32>
    %61 = arith.mulf %59, %59 : vector<1x8xf32>
    %62 = arith.subf %60, %61 : vector<1x8xf32>
    %cst_27 = arith.constant 9.99999974E-6 : f32
    %63 = vector.broadcast %cst_27 : f32 to vector<1x8xf32>
    %64 = arith.addf %62, %63 : vector<1x8xf32>
    %65 = math.rsqrt %64 : vector<1x8xf32>
    %66 = arith.mulf %39, %65 : vector<1x8xf32>
    %67 = arith.mulf %59, %66 : vector<1x8xf32>
    %68 = arith.subf %40, %67 : vector<1x8xf32>
    %69 = tpu.concatenate %66, %68 in 0 : vector<1x8xf32>, vector<1x8xf32> -> vector<2x8xf32>
    %c0_28 = arith.constant 0 : index
    %c0_29 = arith.constant 0 : index
    %70 = vector.load %arg4[%c0_28, %c0_29] : memref<8x128xf32, #tpu.memory_space<vmem>>, vector<8x128xf32>
    %cst_30 = arith.constant dense<0.000000e+00> : vector<2x128xf32>
    %71 = tpu.matmul %69, %70, %cst_30 {dimension_numbers = #tpu.dot_dimension_numbers<[1], [0], [0], [1], [0, 0, 1, 1], [], []>} : vector<2x8xf32>, vector<8x128xf32>, vector<2x128xf32> -> vector<2x128xf32>
    %72 = vector.extract_strided_slice %71 {offsets = [0, 0], sizes = [1, 128], strides = [1, 1]} : vector<2x128xf32> to vector<1x128xf32>
    %73 = vector.broadcast %72 : vector<1x128xf32> to vector<32x128xf32>
    %74 = arith.mulf %50, %73 : vector<32x128xf32>
    %75 = vector.extract_strided_slice %71 {offsets = [1, 0], sizes = [1, 128], strides = [1, 1]} : vector<2x128xf32> to vector<1x128xf32>
    %76 = vector.broadcast %75 : vector<1x128xf32> to vector<32x128xf32>
    %77 = arith.addf %74, %76 : vector<32x128xf32>
    %cst_31 = arith.constant 0.000000e+00 : f32
    %78 = vector.broadcast %cst_31 : f32 to vector<32x128xf32>
    %79 = arith.maximumf %77, %78 : vector<32x128xf32>
    %c0_32 = arith.constant 0 : index
    %c0_33 = arith.constant 0 : index
    %80 = vector.load %arg7[%c0_32, %c0_33] : memref<1x8xf32, #tpu.memory_space<vmem>>, vector<1x8xf32>
    %c0_34 = arith.constant 0 : index
    %c0_35 = arith.constant 0 : index
    %81 = vector.load %arg8[%c0_34, %c0_35] : memref<1x8xf32, #tpu.memory_space<vmem>>, vector<1x8xf32>
    %c1_i32_36 = arith.constant 1 : i32
    %82 = tpu.dynamic_rotate %79 by %c1_i32_36 dim 0 : vector<32x128xf32>, i32 -> vector<32x128xf32>
    %cst_37 = arith.constant 0.000000e+00 : f32
    %83 = vector.broadcast %cst_37 : f32 to vector<32x128xf32>
    %84 = arith.select %19, %82, %83 : vector<32x128xi1>, vector<32x128xf32>
    %c31_i32_38 = arith.constant 31 : i32
    %85 = tpu.dynamic_rotate %79 by %c31_i32_38 dim 0 : vector<32x128xf32>, i32 -> vector<32x128xf32>
    %cst_39 = arith.constant 0.000000e+00 : f32
    %86 = vector.broadcast %cst_39 : f32 to vector<32x128xf32>
    %87 = arith.select %37, %85, %86 : vector<32x128xi1>, vector<32x128xf32>
    %88 = tpu.concatenate %84, %79, %87 in 1 : vector<32x128xf32>, vector<32x128xf32>, vector<32x128xf32> -> vector<32x384xf32>
    %89 = arith.truncf %88 : vector<32x384xf32> to vector<32x384xbf16>
    %c0_40 = arith.constant 0 : index
    %c0_41 = arith.constant 0 : index
    %90 = vector.load %arg2[%c0_40, %c0_41] : memref<384x128xbf16, #tpu.memory_space<vmem>>, vector<384x128xbf16>
    %cst_42 = arith.constant dense<0.000000e+00> : vector<32x128xf32>
    %91 = tpu.matmul %89, %90, %cst_42 {dimension_numbers = #tpu.dot_dimension_numbers<[1], [0], [0], [1], [0, 0, 1, 1], [], []>} : vector<32x384xbf16>, vector<384x128xbf16>, vector<32x128xf32> -> vector<32x128xf32>
    %cst_43 = arith.constant dense<0.000000e+00> : vector<1x128xf32>
    %92 = tpu.matmul %38, %91, %cst_43 {dimension_numbers = #tpu.dot_dimension_numbers<[1], [0], [0], [1], [0, 0, 1, 1], [], []>} : vector<1x32xf32>, vector<32x128xf32>, vector<1x128xf32> -> vector<1x128xf32>
    %93 = arith.mulf %91, %91 : vector<32x128xf32>
    %cst_44 = arith.constant dense<0.000000e+00> : vector<1x128xf32>
    %94 = tpu.matmul %38, %93, %cst_44 {dimension_numbers = #tpu.dot_dimension_numbers<[1], [0], [0], [1], [0, 0, 1, 1], [], []>} : vector<1x32xf32>, vector<32x128xf32>, vector<1x128xf32> -> vector<1x128xf32>
    %95 = tpu.concatenate %92, %94 in 0 : vector<1x128xf32>, vector<1x128xf32> -> vector<2x128xf32>
    %c0_45 = arith.constant 0 : index
    %c0_46 = arith.constant 0 : index
    %96 = vector.load %arg3[%c0_45, %c0_46] : memref<128x8xf32, #tpu.memory_space<vmem>>, vector<128x8xf32>
    %cst_47 = arith.constant dense<0.000000e+00> : vector<2x8xf32>
    %97 = tpu.matmul %95, %96, %cst_47 {dimension_numbers = #tpu.dot_dimension_numbers<[1], [0], [0], [1], [0, 0, 1, 1], [], []>} : vector<2x128xf32>, vector<128x8xf32>, vector<2x8xf32> -> vector<2x8xf32>
    %cst_48 = arith.constant 0.001953125 : f32
    %98 = vector.broadcast %cst_48 : f32 to vector<2x8xf32>
    %99 = arith.mulf %97, %98 : vector<2x8xf32>
    %100 = vector.extract_strided_slice %99 {offsets = [0, 0], sizes = [1, 8], strides = [1, 1]} : vector<2x8xf32> to vector<1x8xf32>
    %101 = vector.extract_strided_slice %99 {offsets = [1, 0], sizes = [1, 8], strides = [1, 1]} : vector<2x8xf32> to vector<1x8xf32>
    %102 = arith.mulf %100, %100 : vector<1x8xf32>
    %103 = arith.subf %101, %102 : vector<1x8xf32>
    %cst_49 = arith.constant 9.99999974E-6 : f32
    %104 = vector.broadcast %cst_49 : f32 to vector<1x8xf32>
    %105 = arith.addf %103, %104 : vector<1x8xf32>
    %106 = math.rsqrt %105 : vector<1x8xf32>
    %107 = arith.mulf %80, %106 : vector<1x8xf32>
    %108 = arith.mulf %100, %107 : vector<1x8xf32>
    %109 = arith.subf %81, %108 : vector<1x8xf32>
    %110 = tpu.concatenate %107, %109 in 0 : vector<1x8xf32>, vector<1x8xf32> -> vector<2x8xf32>
    %c0_50 = arith.constant 0 : index
    %c0_51 = arith.constant 0 : index
    %111 = vector.load %arg4[%c0_50, %c0_51] : memref<8x128xf32, #tpu.memory_space<vmem>>, vector<8x128xf32>
    %cst_52 = arith.constant dense<0.000000e+00> : vector<2x128xf32>
    %112 = tpu.matmul %110, %111, %cst_52 {dimension_numbers = #tpu.dot_dimension_numbers<[1], [0], [0], [1], [0, 0, 1, 1], [], []>} : vector<2x8xf32>, vector<8x128xf32>, vector<2x128xf32> -> vector<2x128xf32>
    %113 = vector.extract_strided_slice %112 {offsets = [0, 0], sizes = [1, 128], strides = [1, 1]} : vector<2x128xf32> to vector<1x128xf32>
    %114 = vector.broadcast %113 : vector<1x128xf32> to vector<32x128xf32>
    %115 = arith.mulf %91, %114 : vector<32x128xf32>
    %116 = vector.extract_strided_slice %112 {offsets = [1, 0], sizes = [1, 128], strides = [1, 1]} : vector<2x128xf32> to vector<1x128xf32>
    %117 = vector.broadcast %116 : vector<1x128xf32> to vector<32x128xf32>
    %118 = arith.addf %115, %117 : vector<32x128xf32>
    %119 = arith.addf %118, %0 : vector<32x128xf32>
    %cst_53 = arith.constant 0.000000e+00 : f32
    %120 = vector.broadcast %cst_53 : f32 to vector<32x128xf32>
    %121 = arith.maximumf %119, %120 : vector<32x128xf32>
    %c0_54 = arith.constant 0 : index
    %c0_55 = arith.constant 0 : index
    %122 = vector.load %arg9[%c0_54, %c0_55] : memref<32x128xf32, #tpu.memory_space<vmem>>, vector<32x128xf32>
    tpu.vector_store %arg9[%c0_54, %c0_55], %121 {strides = array<i32>} : memref<32x128xf32, #tpu.memory_space<vmem>>, vector<32x128xf32>,
    return
  }
}

</mosaic_0001>

<llo_original>
// kernel: tpu_custom_call.1
$region0: #{tpu_custom_call.1}
  #allocation0 [shape = 'u32[]', space=smem, size = 0x4, offset = 0x4, fixed_abs, tag = 'smem constant byte address 0x4 - core index']
  #allocation1 [shape = 'u32[144,128]{1,0:T(1,128)}', space=vmem, size = 0x12000, scoped, tag = 'internal scratch']
  %s0 = inlined_call_operand.vmem [shape: f32[32,128], index: 0, kind: input, shape index: {}]
  %s1 = inlined_call_operand.hbm [shape: bf16[384,128], index: 1, kind: input, shape index: {}]
  %s2 = inlined_call_operand.hbm [shape: bf16[384,128], index: 2, kind: input, shape index: {}]
  %s3 = inlined_call_operand.vmem [shape: f32[128,8], index: 3, kind: input, shape index: {}]
  %s4 = inlined_call_operand.vmem [shape: f32[8,128], index: 4, kind: input, shape index: {}]
  %s5 = inlined_call_operand.vmem [shape: f32[1,8], index: 5, kind: input, shape index: {}]
  %s6 = inlined_call_operand.vmem [shape: f32[1,8], index: 6, kind: input, shape index: {}]
  %s7 = inlined_call_operand.vmem [shape: f32[1,8], index: 7, kind: input, shape index: {}]
  %s8 = inlined_call_operand.vmem [shape: f32[1,8], index: 8, kind: input, shape index: {}]
  %s9 = inlined_call_operand.hbm [shape: f32[32,128], index: 9, kind: output, shape index: {}]
  %s10 = sld [smem:[#allocation0]]
  $region54: #{tpu_custom_call.1} parent=0
    _
  %s12 = ssub.s32 1, %s10
  %s13 = scalar_select 0, %s12, %s10
  $region1: #{tpu_custom_call.1} parent=0
    #allocation2 [shape = 'u8[98304]{0}', space=vmem, size = 0x18000, scoped, tag = 'input window, operand 1, single buffered']
    #allocation3 [shape = 's32[1]{0}', space=sflag, size = 0x4, scoped, tag = 'scoped memory for tpu_custom_call.1']
    #allocation4 [shape = 's32[1]{0}', space=sflag, size = 0x4, scoped, tag = 'scoped memory for tpu_custom_call.1']
    #allocation5 [shape = 'u8[98304]{0}', space=vmem, size = 0x18000, scoped, tag = 'input window, operand 2, single buffered']
    #allocation6 [shape = 's32[1]{0}', space=sflag, size = 0x4, scoped, tag = 'scoped memory for tpu_custom_call.1']
    #allocation7 [shape = 'u8[16384]{0}', space=vmem, size = 0x4000, scoped, tag = 'output window, operand 0, single buffered']
    %14 = vsyncpa [#allocation3], 0
    %15 = vsyncpa [#allocation6], 0
    %16 = vsyncpa [#allocation4], 0
    // Predicated region
    $region2: #{tpu_custom_call.1} parent=1 // pred_check
      _
    $region3: #{tpu_custom_call.1} parent=1 // pred_check_branch
      %18 = sbr.rel (0) target = $region5
    $region4: #{tpu_custom_call.1} parent=1 // pred_region
      _
    $region5: #{tpu_custom_call.1} parent=1 // pred_fallthru
      _
    // Predicated region
    $region6: #{tpu_custom_call.1} parent=1 // pred_check
      _
    $region7: #{tpu_custom_call.1} parent=1 // pred_check_branch
      %20 = sbr.rel (0) target = $region9
    $region8: #{tpu_custom_call.1} parent=1 // pred_region
      %s22 = ssub.s32 3072, 3072
      %23 = vsyncadd [#allocation3], %s22
      %s24 = sshll.u32 [#allocation2], 4
      %s25 = int_to_ptr.vmem [resolvable:$true] %s24
      %30 = dma.hbm_to_vmem [thread:$0]  %s1, 3072, %s25, [#allocation3], 64, 64, 4
    $region9: #{tpu_custom_call.1} parent=1 // pred_fallthru
      _
    // Predicated region
    $region10: #{tpu_custom_call.1} parent=1 // pred_check
      _
    $region11: #{tpu_custom_call.1} parent=1 // pred_check_branch
      %32 = sbr.rel (0) target = $region13
    $region12: #{tpu_custom_call.1} parent=1 // pred_region
      %s34 = ssub.s32 3072, 3072
      %35 = vsyncadd [#allocation6], %s34
      %s36 = sshll.u32 [#allocation5], 4
      %s37 = int_to_ptr.vmem [resolvable:$true] %s36
      %42 = dma.hbm_to_vmem [thread:$0]  %s2, 3072, %s37, [#allocation6], 64, 64, 4
    $region13: #{tpu_custom_call.1} parent=1 // pred_fallthru
      _
    // Predicated region
    $region14: #{tpu_custom_call.1} parent=1 // pred_check
      _
    $region15: #{tpu_custom_call.1} parent=1 // pred_check_branch
      %44 = sbr.rel (0) target = $region17
    $region16: #{tpu_custom_call.1} parent=1 // pred_region
      _
    $region17: #{tpu_custom_call.1} parent=1 // pred_fallthru
      _
    // Predicated region
    $region18: #{tpu_custom_call.1} parent=1 // pred_check
      _
    $region19: #{tpu_custom_call.1} parent=1 // pred_check_branch
      %46 = sbr.rel (0) target = $region21
    $region20: #{tpu_custom_call.1} parent=1 // pred_region
      _
    $region21: #{tpu_custom_call.1} parent=1 // pred_fallthru
      _
    // Predicated region
    $region22: #{tpu_custom_call.1} parent=1 // pred_check
      _
    $region23: #{tpu_custom_call.1} parent=1 // pred_check_branch
      %48 = sbr.rel (0) target = $region25
    $region24: #{tpu_custom_call.1} parent=1 // pred_region
      _
    $region25: #{tpu_custom_call.1} parent=1 // pred_fallthru
      _
    // Predicated region
    $region26: #{tpu_custom_call.1} parent=1 // pred_check
      _
    $region27: #{tpu_custom_call.1} parent=1 // pred_check_branch
      %50 = sbr.rel (0) target = $region29
    $region28: #{tpu_custom_call.1} parent=1 // pred_region
      _
    $region29: #{tpu_custom_call.1} parent=1 // pred_fallthru
      _
    // Predicated region
    $region30: #{tpu_custom_call.1} parent=1 // pred_check
      _
    $region31: #{tpu_custom_call.1} parent=1 // pred_check_branch
      %52 = sbr.rel (0) target = $region33
    $region32: #{tpu_custom_call.1} parent=1 // pred_region
      _
    $region33: #{tpu_custom_call.1} parent=1 // pred_fallthru
      _
    // Predicated region
    $region34: #{tpu_custom_call.1} parent=1 // pred_check
      _
    $region35: #{tpu_custom_call.1} parent=1 // pred_check_branch
      %54 = sbr.rel (0) target = $region37
    $region36: #{tpu_custom_call.1} parent=1 // pred_region
      _
    $region37: #{tpu_custom_call.1} parent=1 // pred_fallthru
      _
    // Predicated region
    $region38: #{tpu_custom_call.1} parent=1 // pred_check
      _
    $region39: #{tpu_custom_call.1} parent=1 // pred_check_branch
      %56 = sbr.rel (0) target = $region41
    $region40: #{tpu_custom_call.1} parent=1 // pred_region
      %57 = dma.done [#allocation3], 3072
    $region41: #{tpu_custom_call.1} parent=1 // pred_fallthru
      _
    // Predicated region
    $region42: #{tpu_custom_call.1} parent=1 // pred_check
      _
    $region43: #{tpu_custom_call.1} parent=1 // pred_check_branch
      %59 = sbr.rel (0) target = $region45
    $region44: #{tpu_custom_call.1} parent=1 // pred_region
      %60 = dma.done [#allocation6], 3072
    $region45: #{tpu_custom_call.1} parent=1 // pred_fallthru
      _
    %v62 = vld [vmem:[%s0] sm:$0xff]
    %v63 = vld [vmem:[%s0 + $0x8] sm:$0xff]
    %v64 = vld [vmem:[%s0 + $0x10] sm:$0xff]
    %v65 = vld [vmem:[%s0 + $0x18] sm:$0xff]
    %v66 = vlaneseq
    %v67 = vshrl.u32 %v66, 7
    %v68 = vadd.s32 %v67, 8
    %v69 = vadd.s32 %v67, 16
    %v70 = vadd.s32 %v67, 24
    %vm71 = vcmp.lt.s32.totalorder %v67, 0
    %v72 = vsub.s32 0, %v67
    %v73 = vsel %vm71, %v72, %v67
    %v74 = vshrl.u32 %v73, 4
    %v75 = vand.u32 %v73, 15
    %v76 = vsub.s32 0, %v75
    %v77 = vsel %vm71, %v76, %v75
    %vm78 = vcmp.lt.s32.totalorder %v68, 0
    %v79 = vsub.s32 0, %v68
    %v80 = vsel %vm78, %v79, %v68
    %v81 = vshrl.u32 %v80, 4
    %v82 = vand.u32 %v80, 15
    %v83 = vsub.s32 0, %v82
    %v84 = vsel %vm78, %v83, %v82
    %vm85 = vcmp.lt.s32.totalorder %v69, 0
    %v86 = vsub.s32 0, %v69
    %v87 = vsel %vm85, %v86, %v69
    %v88 = vshrl.u32 %v87, 4
    %v89 = vand.u32 %v87, 15
    %v90 = vsub.s32 0, %v89
    %v91 = vsel %vm85, %v90, %v89
    %vm92 = vcmp.lt.s32.totalorder %v70, 0
    %v93 = vsub.s32 0, %v70
    %v94 = vsel %vm92, %v93, %v70
    %v95 = vshrl.u32 %v94, 4
    %v96 = vand.u32 %v94, 15
    %v97 = vsub.s32 0, %v96
    %v98 = vsel %vm92, %v97, %v96
    %vm99 = vcmp.ne.s32.totalorder %v77, 0
    %vm100 = vcmp.ne.s32.totalorder %v84, 0
    %vm101 = vcmp.ne.s32.totalorder %v91, 0
    %vm102 = vcmp.ne.s32.totalorder %v98, 0
    %vm103 = vcmp.lt.s32.totalorder %v77, 0
    %vm104 = vcmp.lt.s32.totalorder %v84, 0
    %vm105 = vcmp.lt.s32.totalorder %v91, 0
    %vm106 = vcmp.lt.s32.totalorder %v98, 0
    %vm107 = vmand %vm103, %vm99
    %vm108 = vmand %vm104, %vm100
    %vm109 = vmand %vm105, %vm101
    %vm110 = vmand %vm106, %vm102
    %v111 = vadd.s32 %v77, 16
    %v112 = vadd.s32 %v84, 16
    %v113 = vadd.s32 %v91, 16
    %v114 = vadd.s32 %v98, 16
    %v115 = vsel %vm107, %v111, %v77
    %v116 = vsel %vm108, %v112, %v84
    %v117 = vsel %vm109, %v113, %v91
    %v118 = vsel %vm110, %v114, %v98
    %vm119 = vcmp.ne.s32.totalorder %v115, 0
    %vm120 = vcmp.ne.s32.totalorder %v116, 0
    %vm121 = vcmp.ne.s32.totalorder %v117, 0
    %vm122 = vcmp.ne.s32.totalorder %v118, 0
    %vm123 = vcmp.ne.s32.totalorder %v115, 15
    %vm124 = vcmp.ne.s32.totalorder %v116, 15
    %vm125 = vcmp.ne.s32.totalorder %v117, 15
    %vm126 = vcmp.ne.s32.totalorder %v118, 15
    %v127 = vld [vmem:[%s5] sm:$0x1]
    %v128 = vld [vmem:[%s6] sm:$0x1]
    %v129 = vrot.slane %v62, 7
    %v130 = vrot.slane %v63, 7
    %v131 = vrot.slane %v64, 7
    %v132 = vrot.slane %v65, 7
    %vm133 = vcmp.lt.s32.totalorder %v67, 1
    %v134 = vsel %vm133, %v131, %v132
    %v135 = vsel %vm133, %v130, %v131
    %v136 = vsel %vm133, %v129, %v130
    %v137 = vsel %vm133, %v132, %v129
    %v138 = vsel %vm119, %v137, 0.0
    %v139 = vsel %vm120, %v136, 0.0
    %v140 = vsel %vm121, %v135, 0.0
    %v141 = vsel %vm122, %v134, 0.0
    %v142 = vrot.slane %v62, 1
    %v143 = vrot.slane %v63, 1
    %v144 = vrot.slane %v64, 1
    %v145 = vrot.slane %v65, 1
    %vm146 = vcmp.lt.s32.totalorder %v67, 7
    %v147 = vsel %vm146, %v144, %v145
    %v148 = vsel %vm146, %v143, %v144
    %v149 = vsel %vm146, %v142, %v143
    %v150 = vsel %vm146, %v145, %v142
    %v151 = vsel %vm123, %v149, 0.0
    %v152 = vsel %vm124, %v148, 0.0
    %v153 = vsel %vm125, %v147, 0.0
    %v154 = vsel %vm126, %v150, 0.0
    %v155 = vpack.c.bf16 %v139, %v138
    %v156 = vpack.c.bf16 %v63, %v62
    %v157 = vpack.c.bf16 %v152, %v151
    %v158 = vpack.c.bf16 %v141, %v140
    %v159 = vpack.c.bf16 %v65, %v64
    %v160 = vpack.c.bf16 %v154, %v153
    %v161 = vld [vmem:[#allocation2] sm:$0xf]
    %v162 = vld [vmem:[#allocation2 + $0x4] sm:$0xf]
    %v163 = vld [vmem:[#allocation2 + $0x8] sm:$0xf]
    %v164 = vld [vmem:[#allocation2 + $0xc] sm:$0xf]
    %v165 = vld [vmem:[#allocation2 + $0x10] sm:$0xf]
    %v166 = vld [vmem:[#allocation2 + $0x14] sm:$0xf]
    %v167 = vld [vmem:[#allocation2 + $0x18] sm:$0xf]
    %v168 = vld [vmem:[#allocation2 + $0x1c] sm:$0xf]
    %v169 = vld [vmem:[#allocation2 + $0x20] sm:$0xf]
    %v170 = vld [vmem:[#allocation2 + $0x24] sm:$0xf]
    %v171 = vld [vmem:[#allocation2 + $0x28] sm:$0xf]
    %v172 = vld [vmem:[#allocation2 + $0x2c] sm:$0xf]
    %v173 = vld [vmem:[#allocation2 + $0x30] sm:$0xf]
    %v174 = vld [vmem:[#allocation2 + $0x34] sm:$0xf]
    %v175 = vld [vmem:[#allocation2 + $0x38] sm:$0xf]
    %v176 = vld [vmem:[#allocation2 + $0x3c] sm:$0xf]
    %v177 = vld [vmem:[#allocation2 + $0x40] sm:$0xf]
    %v178 = vld [vmem:[#allocation2 + $0x44] sm:$0xf]
    %v179 = vld [vmem:[#allocation2 + $0x48] sm:$0xf]
    %v180 = vld [vmem:[#allocation2 + $0x4c] sm:$0xf]
    %v181 = vld [vmem:[#allocation2 + $0x50] sm:$0xf]
    %v182 = vld [vmem:[#allocation2 + $0x54] sm:$0xf]
    %v183 = vld [vmem:[#allocation2 + $0x58] sm:$0xf]
    %v184 = vld [vmem:[#allocation2 + $0x5c] sm:$0xf]
    %v185 = vld [vmem:[#allocation2 + $0x60] sm:$0xf]
    %v186 = vld [vmem:[#allocation2 + $0x64] sm:$0xf]
    %v187 = vld [vmem:[#allocation2 + $0x68] sm:$0xf]
    %v188 = vld [vmem:[#allocation2 + $0x6c] sm:$0xf]
    %v189 = vld [vmem:[#allocation2 + $0x70] sm:$0xf]
    %v190 = vld [vmem:[#allocation2 + $0x74] sm:$0xf]
    %v191 = vld [vmem:[#allocation2 + $0x78] sm:$0xf]
    %v192 = vld [vmem:[#allocation2 + $0x7c] sm:$0xf]
    %v193 = vld [vmem:[#allocation2 + $0x80] sm:$0xf]
    %v194 = vld [vmem:[#allocation2 + $0x84] sm:$0xf]
    %v195 = vld [vmem:[#allocation2 + $0x88] sm:$0xf]
    %v196 = vld [vmem:[#allocation2 + $0x8c] sm:$0xf]
    %v197 = vld [vmem:[#allocation2 + $0x90] sm:$0xf]
    %v198 = vld [vmem:[#allocation2 + $0x94] sm:$0xf]
    %v199 = vld [vmem:[#allocation2 + $0x98] sm:$0xf]
    %v200 = vld [vmem:[#allocation2 + $0x9c] sm:$0xf]
    %v201 = vld [vmem:[#allocation2 + $0xa0] sm:$0xf]
    %v202 = vld [vmem:[#allocation2 + $0xa4] sm:$0xf]
    %v203 = vld [vmem:[#allocation2 + $0xa8] sm:$0xf]
    %v204 = vld [vmem:[#allocation2 + $0xac] sm:$0xf]
    %v205 = vld [vmem:[#allocation2 + $0xb0] sm:$0xf]
    %v206 = vld [vmem:[#allocation2 + $0xb4] sm:$0xf]
    %v207 = vld [vmem:[#allocation2 + $0xb8] sm:$0xf]
    %v208 = vld [vmem:[#allocation2 + $0xbc] sm:$0xf]
    %v257 = vunpack.c.l.b16 %v161
    %v258 = vunpack.c.l.b16 %v162
    %v259 = vunpack.c.l.b16 %v163
    %v260 = vunpack.c.l.b16 %v164
    %v261 = vunpack.c.l.b16 %v165
    %v262 = vunpack.c.l.b16 %v166
    %v263 = vunpack.c.l.b16 %v167
    %v264 = vunpack.c.l.b16 %v168
    %v265 = vunpack.c.l.b16 %v169
    %v266 = vunpack.c.l.b16 %v170
    %v267 = vunpack.c.l.b16 %v171
    %v268 = vunpack.c.l.b16 %v172
    %v269 = vunpack.c.l.b16 %v173
    %v270 = vunpack.c.l.b16 %v174
    %v271 = vunpack.c.l.b16 %v175
    %v272 = vunpack.c.l.b16 %v176
    %v273 = vunpack.c.l.b16 %v177
    %v274 = vunpack.c.l.b16 %v178
    %v275 = vunpack.c.l.b16 %v179
    %v276 = vunpack.c.l.b16 %v180
    %v277 = vunpack.c.l.b16 %v181
    %v278 = vunpack.c.l.b16 %v182
    %v279 = vunpack.c.l.b16 %v183
    %v280 = vunpack.c.l.b16 %v184
    %v281 = vunpack.c.l.b16 %v185
    %v282 = vunpack.c.l.b16 %v186
    %v283 = vunpack.c.l.b16 %v187
    %v284 = vunpack.c.l.b16 %v188
    %v285 = vunpack.c.l.b16 %v189
    %v286 = vunpack.c.l.b16 %v190
    %v287 = vunpack.c.l.b16 %v191
    %v288 = vunpack.c.l.b16 %v192
    %v289 = vunpack.c.l.b16 %v193
    %v290 = vunpack.c.l.b16 %v194
    %v291 = vunpack.c.l.b16 %v195
    %v292 = vunpack.c.l.b16 %v196
    %v293 = vunpack.c.l.b16 %v197
    %v294 = vunpack.c.l.b16 %v198
    %v295 = vunpack.c.l.b16 %v199
    %v296 = vunpack.c.l.b16 %v200
    %v297 = vunpack.c.l.b16 %v201
    %v298 = vunpack.c.l.b16 %v202
    %v299 = vunpack.c.l.b16 %v203
    %v300 = vunpack.c.l.b16 %v204
    %v301 = vunpack.c.l.b16 %v205
    %v302 = vunpack.c.l.b16 %v206
    %v303 = vunpack.c.l.b16 %v207
    %v304 = vunpack.c.l.b16 %v208
    %v305 = vpack.c.b16 %v258, %v257
    %v306 = vpack.c.b16 %v260, %v259
    %v307 = vpack.c.b16 %v262, %v261
    %v308 = vpack.c.b16 %v264, %v263
    %v309 = vpack.c.b16 %v266, %v265
    %v310 = vpack.c.b16 %v268, %v267
    %v311 = vpack.c.b16 %v270, %v269
    %v312 = vpack.c.b16 %v272, %v271
    %v313 = vpack.c.b16 %v274, %v273
    %v314 = vpack.c.b16 %v276, %v275
    %v315 = vpack.c.b16 %v278, %v277
    %v316 = vpack.c.b16 %v280, %v279
    %v317 = vpack.c.b16 %v282, %v281
    %v318 = vpack.c.b16 %v284, %v283
    %v319 = vpack.c.b16 %v286, %v285
    %v320 = vpack.c.b16 %v288, %v287
    %v321 = vpack.c.b16 %v290, %v289
    %v322 = vpack.c.b16 %v292, %v291
    %v323 = vpack.c.b16 %v294, %v293
    %v324 = vpack.c.b16 %v296, %v295
    %v325 = vpack.c.b16 %v298, %v297
    %v326 = vpack.c.b16 %v300, %v299
    %v327 = vpack.c.b16 %v302, %v301
    %v328 = vpack.c.b16 %v304, %v303
    %353 = vmatprep.subr.bf16.mxu0 0
    %354 = vmatpush1.bf16.msra.mxu0 %v305
    %355 = vmatprep.subr.bf16.mxu0 0
    %356 = vmatpush1.bf16.msra.mxu0 %v306
    %357 = vmatprep.subr.bf16.mxu0 0
    %358 = vmatpush1.bf16.msra.mxu0 %v307
    %359 = vmatprep.subr.bf16.mxu0 0
    %360 = vmatpush1.bf16.msra.mxu0 %v308
    %361 = vmatprep.subr.bf16.mxu0 0
    %362 = vmatpush1.bf16.msra.mxu0 %v309
    %363 = vmatprep.subr.bf16.mxu0 0
    %364 = vmatpush1.bf16.msra.mxu0 %v310
    %365 = vmatprep.subr.bf16.mxu0 0
    %366 = vmatpush1.bf16.msra.mxu0 %v311
    %367 = vmatprep.subr.bf16.mxu0 0
    %368 = vmatpush1.bf16.msra.mxu0 %v312
    %369 = vmatprep.subr.bf16.mxu0 0
    %370 = vmatpush1.bf16.msra.mxu0 %v313
    %371 = vmatprep.subr.bf16.mxu0 0
    %372 = vmatpush1.bf16.msra.mxu0 %v314
    %373 = vmatprep.subr.bf16.mxu0 0
    %374 = vmatpush1.bf16.msra.mxu0 %v315
    %375 = vmatprep.subr.bf16.mxu0 0
    %376 = vmatpush1.bf16.msra.mxu0 %v316
    %377 = vmatprep.subr.bf16.mxu0 0
    %378 = vmatpush1.bf16.msra.mxu0 %v317
    %379 = vmatprep.subr.bf16.mxu0 0
    %380 = vmatpush1.bf16.msra.mxu0 %v318
    %381 = vmatprep.subr.bf16.mxu0 0
    %382 = vmatpush1.bf16.msra.mxu0 %v319
    %383 = vmatprep.subr.bf16.mxu0 0
    %384 = vmatpush1.bf16.msra.mxu0 %v320
    %385 = vmatprep.mubr.bf16.mxu0 %v156
    %386 = vmatmul.mubr.bf16.gmra.mrb[0].mxu0 %v155
    %v387 = vpop.f32.mrb[0].mxu0
    %v388 = vadd.f32 0.0, %v387
    %v389 = vpop.f32.mrb[0].mxu0
    %v390 = vpop.f32.mrb[0].mxu0
    %v391 = vadd.f32 0.0, %v390
    %v392 = vpop.f32.mrb[0].mxu0
    %393 = vmatprep.mubr.bf16.mxu0 %v159
    %394 = vmatmul.mubr.bf16.gmra.mrb[0].mxu0 %v158
    %v395 = vpop.f32.mrb[0].mxu0
    %v396 = vadd.f32 0.0, %v395
    %v397 = vpop.f32.mrb[0].mxu0
    %v398 = vpop.f32.mrb[0].mxu0
    %v399 = vadd.f32 0.0, %v398
    %v400 = vpop.f32.mrb[0].mxu0
    %401 = vdwg.mxu0
    %402 = vmatprep.subr.bf16.mxu0 0
    %403 = vmatpush1.bf16.msra.mxu0 %v321
    %404 = vmatprep.subr.bf16.mxu0 0
    %405 = vmatpush1.bf16.msra.mxu0 %v322
    %406 = vmatprep.subr.bf16.mxu0 0
    %407 = vmatpush1.bf16.msra.mxu0 %v323
    %408 = vmatprep.subr.bf16.mxu0 0
    %409 = vmatpush1.bf16.msra.mxu0 %v324
    %410 = vmatprep.subr.bf16.mxu0 0
    %411 = vmatpush1.bf16.msra.mxu0 %v325
    %412 = vmatprep.subr.bf16.mxu0 0
    %413 = vmatpush1.bf16.msra.mxu0 %v326
    %414 = vmatprep.subr.bf16.mxu0 0
    %415 = vmatpush1.bf16.msra.mxu0 %v327
    %416 = vmatprep.subr.bf16.mxu0 0
    %417 = vmatpush1.bf16.msra.mxu0 %v328
    %418 = vmatprep.subr.bf16.mxu0 0
    %419 = vmatpush1.bf16.msra.mxu0 0
    %420 = vmatprep.subr.bf16.mxu0 0
    %421 = vmatpush1.bf16.msra.mxu0 0
    %422 = vmatprep.subr.bf16.mxu0 0
    %423 = vmatpush1.bf16.msra.mxu0 0
    %424 = vmatprep.subr.bf16.mxu0 0
    %425 = vmatpush1.bf16.msra.mxu0 0
    %426 = vmatprep.subr.bf16.mxu0 0
    %427 = vmatpush1.bf16.msra.mxu0 0
    %428 = vmatprep.subr.bf16.mxu0 0
    %429 = vmatpush1.bf16.msra.mxu0 0
    %430 = vmatprep.subr.bf16.mxu0 0
    %431 = vmatpush1.bf16.msra.mxu0 0
    %432 = vmatprep.subr.bf16.mxu0 0
    %433 = vmatpush1.bf16.msra.mxu0 0
    %434 = vmatprep.mubr.bf16.mxu0 0
    %435 = vmatmul.mubr.bf16.gmra.mrb[0].mxu0 %v157
    %v436 = vpop.f32.mrb[0].mxu0
    %v437 = vadd.f32 %v388, %v436
    %v438 = vpop.f32.mrb[0].mxu0
    %v439 = vpop.f32.mrb[0].mxu0
    %v440 = vadd.f32 %v391, %v439
    %v441 = vpop.f32.mrb[0].mxu0
    %442 = vmatprep.mubr.bf16.mxu0 0
    %443 = vmatmul.mubr.bf16.gmra.mrb[0].mxu0 %v160
    %v444 = vpop.f32.mrb[0].mxu0
    %v445 = vadd.f32 %v396, %v444
    %v446 = vpop.f32.mrb[0].mxu0
    %v447 = vpop.f32.mrb[0].mxu0
    %v448 = vadd.f32 %v399, %v447
    %v449 = vpop.f32.mrb[0].mxu0
    %450 = vdwg.mxu0
    %vm451 = vcmask 261120
    %v453 = vsel %vm451, 1.0, 0
    %455 = vmatprep.subr.mxu0 0.0
    %456 = vmatpush1.msra.mxu0 %v437
    %457 = vmatprep.subr.mxu0 0.0
    %458 = vmatpush1.msra.mxu0 %v440
    %459 = vmatprep.subr.mxu0 0.0
    %460 = vmatpush1.msra.mxu0 %v445
    %461 = vmatprep.subr.mxu0 0.0
    %462 = vmatpush1.msra.mxu0 %v448
    %463 = vmatprep.subr.mxu0 0.0
    %464 = vmatpush1.msra.mxu0 0.0
    %465 = vmatprep.subr.mxu0 0.0
    %466 = vmatpush1.msra.mxu0 0.0
    %467 = vmatprep.subr.mxu0 0.0
    %468 = vmatpush1.msra.mxu0 0.0
    %469 = vmatprep.subr.mxu0 0.0
    %470 = vmatpush1.msra.mxu0 0.0
    %471 = vmatprep.subr.mxu0 0.0
    %472 = vmatpush1.msra.mxu0 0.0
    %473 = vmatprep.subr.mxu0 0.0
    %474 = vmatpush1.msra.mxu0 0.0
    %475 = vmatprep.subr.mxu0 0.0
    %476 = vmatpush1.msra.mxu0 0.0
    %477 = vmatprep.subr.mxu0 0.0
    %478 = vmatpush1.msra.mxu0 0.0
    %479 = vmatprep.subr.mxu0 0.0
    %480 = vmatpush1.msra.mxu0 0.0
    %481 = vmatprep.subr.mxu0 0.0
    %482 = vmatpush1.msra.mxu0 0.0
    %483 = vmatprep.subr.mxu0 0.0
    %484 = vmatpush1.msra.mxu0 0.0
    %485 = vmatprep.subr.mxu0 0.0
    %486 = vmatpush1.msra.mxu0 0.0
    %487 = vmatprep.subr.mxu0 0.0
    %488 = vmatpush1.msra.mxu0 0.0
    %489 = vmatprep.subr.mxu0 0.0
    %490 = vmatpush1.msra.mxu0 0.0
    %491 = vmatprep.subr.mxu0 0.0
    %492 = vmatpush1.msra.mxu0 0.0
    %493 = vmatprep.subr.mxu0 0.0
    %494 = vmatpush1.msra.mxu0 0.0
    %495 = vmatprep.subr.mxu0 0.0
    %496 = vmatpush1.msra.mxu0 0.0
    %497 = vmatprep.subr.mxu0 0.0
    %498 = vmatpush1.msra.mxu0 0.0
    %499 = vmatprep.subr.mxu0 0.0
    %500 = vmatpush1.msra.mxu0 0.0
    %501 = vmatprep.subr.mxu0 0.0
    %502 = vmatpush1.msra.mxu0 0.0
    %503 = vmatprep.subr.mxu0 0.0
    %504 = vmatpush1.msra.mxu0 0.0
    %505 = vmatprep.subr.mxu0 0.0
    %506 = vmatpush1.msra.mxu0 0.0
    %507 = vmatprep.subr.mxu0 0.0
    %508 = vmatpush1.msra.mxu0 0.0
    %509 = vmatprep.subr.mxu0 0.0
    %510 = vmatpush1.msra.mxu0 0.0
    %511 = vmatprep.subr.mxu0 0.0
    %512 = vmatpush1.msra.mxu0 0.0
    %513 = vmatprep.subr.mxu0 0.0
    %514 = vmatpush1.msra.mxu0 0.0
    %515 = vmatprep.subr.mxu0 0.0
    %516 = vmatpush1.msra.mxu0 0.0
    %517 = vmatprep.subr.mxu0 0.0
    %518 = vmatpush1.msra.mxu0 0.0
    %519 = vmatprep.mubr.f32.mxu0 0.0
    %520 = vmatmul.mubr.f32.gmra.mrb[0].mxu0 %v453
    %v521 = vpop.f32.mrb[0].mxu0
    %v522 = vadd.f32 0.0, %v521
    %v523 = vpop.f32.mrb[0].mxu0
    %524 = vdwg.mxu0
    %v525 = vmul.f32 %v437, %v437
    %v526 = vmul.f32 %v440, %v440
    %v527 = vmul.f32 %v445, %v445
    %v528 = vmul.f32 %v448, %v448
    %529 = vmatprep.subr.mxu0 0.0
    %530 = vmatpush1.msra.mxu0 %v525
    %531 = vmatprep.subr.mxu0 0.0
    %532 = vmatpush1.msra.mxu0 %v526
    %533 = vmatprep.subr.mxu0 0.0
    %534 = vmatpush1.msra.mxu0 %v527
    %535 = vmatprep.subr.mxu0 0.0
    %536 = vmatpush1.msra.mxu0 %v528
    %537 = vmatprep.subr.mxu0 0.0
    %538 = vmatpush1.msra.mxu0 0.0
    %539 = vmatprep.subr.mxu0 0.0
    %540 = vmatpush1.msra.mxu0 0.0
    %541 = vmatprep.subr.mxu0 0.0
    %542 = vmatpush1.msra.mxu0 0.0
    %543 = vmatprep.subr.mxu0 0.0
    %544 = vmatpush1.msra.mxu0 0.0
    %545 = vmatprep.subr.mxu0 0.0
    %546 = vmatpush1.msra.mxu0 0.0
    %547 = vmatprep.subr.mxu0 0.0
    %548 = vmatpush1.msra.mxu0 0.0
    %549 = vmatprep.subr.mxu0 0.0
    %550 = vmatpush1.msra.mxu0 0.0
    %551 = vmatprep.subr.mxu0 0.0
    %552 = vmatpush1.msra.mxu0 0.0
    %553 = vmatprep.subr.mxu0 0.0
    %554 = vmatpush1.msra.mxu0 0.0
    %555 = vmatprep.subr.mxu0 0.0
    %556 = vmatpush1.msra.mxu0 0.0
    %557 = vmatprep.subr.mxu0 0.0
    %558 = vmatpush1.msra.mxu0 0.0
    %559 = vmatprep.subr.mxu0 0.0
    %560 = vmatpush1.msra.mxu0 0.0
    %561 = vmatprep.subr.mxu0 0.0
    %562 = vmatpush1.msra.mxu0 0.0
    %563 = vmatprep.subr.mxu0 0.0
    %564 = vmatpush1.msra.mxu0 0.0
    %565 = vmatprep.subr.mxu0 0.0
    %566 = vmatpush1.msra.mxu0 0.0
    %567 = vmatprep.subr.mxu0 0.0
    %568 = vmatpush1.msra.mxu0 0.0
    %569 = vmatprep.subr.mxu0 0.0
    %570 = vmatpush1.msra.mxu0 0.0
    %571 = vmatprep.subr.mxu0 0.0
    %572 = vmatpush1.msra.mxu0 0.0
    %573 = vmatprep.subr.mxu0 0.0
    %574 = vmatpush1.msra.mxu0 0.0
    %575 = vmatprep.subr.mxu0 0.0
    %576 = vmatpush1.msra.mxu0 0.0
    %577 = vmatprep.subr.mxu0 0.0
    %578 = vmatpush1.msra.mxu0 0.0
    %579 = vmatprep.subr.mxu0 0.0
    %580 = vmatpush1.msra.mxu0 0.0
    %581 = vmatprep.subr.mxu0 0.0
    %582 = vmatpush1.msra.mxu0 0.0
    %583 = vmatprep.subr.mxu0 0.0
    %584 = vmatpush1.msra.mxu0 0.0
    %585 = vmatprep.subr.mxu0 0.0
    %586 = vmatpush1.msra.mxu0 0.0
    %587 = vmatprep.subr.mxu0 0.0
    %588 = vmatpush1.msra.mxu0 0.0
    %589 = vmatprep.subr.mxu0 0.0
    %590 = vmatpush1.msra.mxu0 0.0
    %591 = vmatprep.subr.mxu0 0.0
    %592 = vmatpush1.msra.mxu0 0.0
    %593 = vmatprep.mubr.f32.mxu0 0.0
    %594 = vmatmul.mubr.f32.gmra.mrb[0].mxu0 %v453
    %v595 = vpop.f32.mrb[0].mxu0
    %v596 = vadd.f32 0.0, %v595
    %v597 = vpop.f32.mrb[0].mxu0
    %598 = vdwg.mxu0
    %v600 = vrot.slane %v596, 7
    %vm602 = vcmask 1040384
    %v603 = vsel %vm602, %v522, %v600
    %v604 = vld [vmem:[%s3] sm:$0xff]
    %v605 = vld [vmem:[%s3 + $0x8] sm:$0xff]
    %v606 = vld [vmem:[%s3 + $0x10] sm:$0xff]
    %v607 = vld [vmem:[%s3 + $0x18] sm:$0xff]
    %v608 = vld [vmem:[%s3 + $0x20] sm:$0xff]
    %v609 = vld [vmem:[%s3 + $0x28] sm:$0xff]
    %v610 = vld [vmem:[%s3 + $0x30] sm:$0xff]
    %v611 = vld [vmem:[%s3 + $0x38] sm:$0xff]
    %v612 = vld [vmem:[%s3 + $0x40] sm:$0xff]
    %v613 = vld [vmem:[%s3 + $0x48] sm:$0xff]
    %v614 = vld [vmem:[%s3 + $0x50] sm:$0xff]
    %v615 = vld [vmem:[%s3 + $0x58] sm:$0xff]
    %v616 = vld [vmem:[%s3 + $0x60] sm:$0xff]
    %v617 = vld [vmem:[%s3 + $0x68] sm:$0xff]
    %v618 = vld [vmem:[%s3 + $0x70] sm:$0xff]
    %v619 = vld [vmem:[%s3 + $0x78] sm:$0xff]
    %620 = vmatprep.subr.mxu0 0.0
    %621 = vmatpush1.msra.mxu0 %v604
    %622 = vmatprep.subr.mxu0 0.0
    %623 = vmatpush1.msra.mxu0 %v605
    %624 = vmatprep.subr.mxu0 0.0
    %625 = vmatpush1.msra.mxu0 %v606
    %626 = vmatprep.subr.mxu0 0.0
    %627 = vmatpush1.msra.mxu0 %v607
    %628 = vmatprep.subr.mxu0 0.0
    %629 = vmatpush1.msra.mxu0 %v608
    %630 = vmatprep.subr.mxu0 0.0
    %631 = vmatpush1.msra.mxu0 %v609
    %632 = vmatprep.subr.mxu0 0.0
    %633 = vmatpush1.msra.mxu0 %v610
    %634 = vmatprep.subr.mxu0 0.0
    %635 = vmatpush1.msra.mxu0 %v611
    %636 = vmatprep.subr.mxu0 0.0
    %637 = vmatpush1.msra.mxu0 %v612
    %638 = vmatprep.subr.mxu0 0.0
    %639 = vmatpush1.msra.mxu0 %v613
    %640 = vmatprep.subr.mxu0 0.0
    %641 = vmatpush1.msra.mxu0 %v614
    %642 = vmatprep.subr.mxu0 0.0
    %643 = vmatpush1.msra.mxu0 %v615
    %644 = vmatprep.subr.mxu0 0.0
    %645 = vmatpush1.msra.mxu0 %v616
    %646 = vmatprep.subr.mxu0 0.0
    %647 = vmatpush1.msra.mxu0 %v617
    %648 = vmatprep.subr.mxu0 0.0
    %649 = vmatpush1.msra.mxu0 %v618
    %650 = vmatprep.subr.mxu0 0.0
    %651 = vmatpush1.msra.mxu0 %v619
    %652 = vmatprep.subr.mxu0 0.0
    %653 = vmatpush1.msra.mxu0 0.0
    %654 = vmatprep.subr.mxu0 0.0
    %655 = vmatpush1.msra.mxu0 0.0
    %656 = vmatprep.subr.mxu0 0.0
    %657 = vmatpush1.msra.mxu0 0.0
    %658 = vmatprep.subr.mxu0 0.0
    %659 = vmatpush1.msra.mxu0 0.0
    %660 = vmatprep.subr.mxu0 0.0
    %661 = vmatpush1.msra.mxu0 0.0
    %662 = vmatprep.subr.mxu0 0.0
    %663 = vmatpush1.msra.mxu0 0.0
    %664 = vmatprep.subr.mxu0 0.0
    %665 = vmatpush1.msra.mxu0 0.0
    %666 = vmatprep.subr.mxu0 0.0
    %667 = vmatpush1.msra.mxu0 0.0
    %668 = vmatprep.subr.mxu0 0.0
    %669 = vmatpush1.msra.mxu0 0.0
    %670 = vmatprep.subr.mxu0 0.0
    %671 = vmatpush1.msra.mxu0 0.0
    %672 = vmatprep.subr.mxu0 0.0
    %673 = vmatpush1.msra.mxu0 0.0
    %674 = vmatprep.subr.mxu0 0.0
    %675 = vmatpush1.msra.mxu0 0.0
    %676 = vmatprep.subr.mxu0 0.0
    %677 = vmatpush1.msra.mxu0 0.0
    %678 = vmatprep.subr.mxu0 0.0
    %679 = vmatpush1.msra.mxu0 0.0
    %680 = vmatprep.subr.mxu0 0.0
    %681 = vmatpush1.msra.mxu0 0.0
    %682 = vmatprep.subr.mxu0 0.0
    %683 = vmatpush1.msra.mxu0 0.0
    %684 = vmatprep.mubr.f32.mxu0 0.0
    %685 = vmatmul.mubr.f32.gmra.mrb[0].mxu0 %v603
    %v686 = vpop.f32.mrb[0].mxu0
    %v687 = vadd.f32 0.0, %v686
    %v688 = vpop.f32.mrb[0].mxu0
    %689 = vdwg.mxu0
    %v690 = vmul.f32 %v687, 0.001953125
    %v691 = vmul.f32 %v690, %v690
    %v693 = vrot.slane %v691, 7
    %v695 = vsub.f32 %v690, %v693
    %v696 = vadd.f32 %v695, 1e-05
    %v697 = vrsqrt.pop %v696
    %v700 = vunpack.c.l.s4 1966171168
    %v701 = vunpack.c.0.s8 %v700
    %v702 = vlaneseq
    %v703 = vshrl.u32 %v702, 7
    %v704 = vsub.s32 %v701, %v703
    %v705 = vrot.slane %v697, %v704
    %v706 = vcombine.high %v705, %v705
    %v708 = vunpack.c.l.s4 1966171168
    %v709 = vunpack.c.0.s8 %v708
    %v710 = vlaneseq
    %v711 = vshrl.u32 %v710, 7
    %v712 = vsub.s32 %v709, %v711
    %v713 = vrot.slane %v706, %v712
    %v715 = vmul.f32 %v127, %v713
    %v716 = vmul.f32 %v690, %v715
    %v717 = vsub.f32 %v128, %v716
    %v719 = vlaneseq
    %v720 = vshrl.u32 %v719, 7
    %v721 = vsub.s32 0, %v720
    %v722 = vrot.slane %v717, %v721
    %v724 = vsel %vm602, %v715, %v722
    %v725 = vld [vmem:[%s4] sm:$0xff]
    %vm726 = vcmask 64512
    %v728 = vsel %vm726, %v724, 0
    %730 = vmatprep.subr.mxu0 0.0
    %731 = vmatpush1.msra.mxu0 %v725
    %732 = vmatprep.subr.mxu0 0.0
    %733 = vmatpush1.msra.mxu0 0.0
    %734 = vmatprep.subr.mxu0 0.0
    %735 = vmatpush1.msra.mxu0 0.0
    %736 = vmatprep.subr.mxu0 0.0
    %737 = vmatpush1.msra.mxu0 0.0
    %738 = vmatprep.subr.mxu0 0.0
    %739 = vmatpush1.msra.mxu0 0.0
    %740 = vmatprep.subr.mxu0 0.0
    %741 = vmatpush1.msra.mxu0 0.0
    %742 = vmatprep.subr.mxu0 0.0
    %743 = vmatpush1.msra.mxu0 0.0
    %744 = vmatprep.subr.mxu0 0.0
    %745 = vmatpush1.msra.mxu0 0.0
    %746 = vmatprep.subr.mxu0 0.0
    %747 = vmatpush1.msra.mxu0 0.0
    %748 = vmatprep.subr.mxu0 0.0
    %749 = vmatpush1.msra.mxu0 0.0
    %750 = vmatprep.subr.mxu0 0.0
    %751 = vmatpush1.msra.mxu0 0.0
    %752 = vmatprep.subr.mxu0 0.0
    %753 = vmatpush1.msra.mxu0 0.0
    %754 = vmatprep.subr.mxu0 0.0
    %755 = vmatpush1.msra.mxu0 0.0
    %756 = vmatprep.subr.mxu0 0.0
    %757 = vmatpush1.msra.mxu0 0.0
    %758 = vmatprep.subr.mxu0 0.0
    %759 = vmatpush1.msra.mxu0 0.0
    %760 = vmatprep.subr.mxu0 0.0
    %761 = vmatpush1.msra.mxu0 0.0
    %762 = vmatprep.subr.mxu0 0.0
    %763 = vmatpush1.msra.mxu0 0.0
    %764 = vmatprep.subr.mxu0 0.0
    %765 = vmatpush1.msra.mxu0 0.0
    %766 = vmatprep.subr.mxu0 0.0
    %767 = vmatpush1.msra.mxu0 0.0
    %768 = vmatprep.subr.mxu0 0.0
    %769 = vmatpush1.msra.mxu0 0.0
    %770 = vmatprep.subr.mxu0 0.0
    %771 = vmatpush1.msra.mxu0 0.0
    %772 = vmatprep.subr.mxu0 0.0
    %773 = vmatpush1.msra.mxu0 0.0
    %774 = vmatprep.subr.mxu0 0.0
    %775 = vmatpush1.msra.mxu0 0.0
    %776 = vmatprep.subr.mxu0 0.0
    %777 = vmatpush1.msra.mxu0 0.0
    %778 = vmatprep.subr.mxu0 0.0
    %779 = vmatpush1.msra.mxu0 0.0
    %780 = vmatprep.subr.mxu0 0.0
    %781 = vmatpush1.msra.mxu0 0.0
    %782 = vmatprep.subr.mxu0 0.0
    %783 = vmatpush1.msra.mxu0 0.0
    %784 = vmatprep.subr.mxu0 0.0
    %785 = vmatpush1.msra.mxu0 0.0
    %786 = vmatprep.subr.mxu0 0.0
    %787 = vmatpush1.msra.mxu0 0.0
    %788 = vmatprep.subr.mxu0 0.0
    %789 = vmatpush1.msra.mxu0 0.0
    %790 = vmatprep.subr.mxu0 0.0
    %791 = vmatpush1.msra.mxu0 0.0
    %792 = vmatprep.subr.mxu0 0.0
    %793 = vmatpush1.msra.mxu0 0.0
    %794 = vmatprep.mubr.f32.mxu0 0.0
    %795 = vmatmul.mubr.f32.gmra.mrb[0].mxu0 %v728
    %v796 = vpop.f32.mrb[0].mxu0
    %v797 = vadd.f32 0.0, %v796
    %v798 = vpop.f32.mrb[0].mxu0
    %799 = vdwg.mxu0
    %v800 = vlaneseq
    %v801 = vshrl.u32 %v800, 7
    %v802 = vsub.s32 0, %v801
    %v803 = vrot.slane %v797, %v802
    %v804 = vmul.f32 %v437, %v803
    %v805 = vmul.f32 %v440, %v803
    %v806 = vmul.f32 %v445, %v803
    %v807 = vmul.f32 %v448, %v803
    %v808 = vlaneseq
    %v809 = vshrl.u32 %v808, 7
    %v810 = vsub.s32 1, %v809
    %v811 = vrot.slane %v797, %v810
    %v812 = vadd.f32 %v804, %v811
    %v813 = vadd.f32 %v805, %v811
    %v814 = vadd.f32 %v806, %v811
    %v815 = vadd.f32 %v807, %v811
    %v816 = vmax.f32 %v812, 0.0
    %v817 = vmax.f32 %v813, 0.0
    %v818 = vmax.f32 %v814, 0.0
    %v819 = vmax.f32 %v815, 0.0
    %v820 = vld [vmem:[%s7] sm:$0x1]
    %v821 = vld [vmem:[%s8] sm:$0x1]
    %v822 = vrot.slane %v816, 7
    %v823 = vrot.slane %v817, 7
    %v824 = vrot.slane %v818, 7
    %v825 = vrot.slane %v819, 7
    %v826 = vsel %vm133, %v824, %v825
    %v827 = vsel %vm133, %v823, %v824
    %v828 = vsel %vm133, %v822, %v823
    %v829 = vsel %vm133, %v825, %v822
    %v830 = vsel %vm119, %v829, 0.0
    %v831 = vsel %vm120, %v828, 0.0
    %v832 = vsel %vm121, %v827, 0.0
    %v833 = vsel %vm122, %v826, 0.0
    %v834 = vrot.slane %v816, 1
    %v835 = vrot.slane %v817, 1
    %v836 = vrot.slane %v818, 1
    %v837 = vrot.slane %v819, 1
    %v838 = vsel %vm146, %v836, %v837
    %v839 = vsel %vm146, %v835, %v836
    %v840 = vsel %vm146, %v834, %v835
    %v841 = vsel %vm146, %v837, %v834
    %v842 = vsel %vm123, %v840, 0.0
    %v843 = vsel %vm124, %v839, 0.0
    %v844 = vsel %vm125, %v838, 0.0
    %v845 = vsel %vm126, %v841, 0.0
    %v846 = vpack.c.bf16 %v831, %v830
    %v847 = vpack.c.bf16 %v817, %v816
    %v848 = vpack.c.bf16 %v843, %v842
    %v849 = vpack.c.bf16 %v833, %v832
    %v850 = vpack.c.bf16 %v819, %v818
    %v851 = vpack.c.bf16 %v845, %v844
    %v852 = vld [vmem:[#allocation5] sm:$0xf]
    %v853 = vld [vmem:[#allocation5 + $0x4] sm:$0xf]
    %v854 = vld [vmem:[#allocation5 + $0x8] sm:$0xf]
    %v855 = vld [vmem:[#allocation5 + $0xc] sm:$0xf]
    %v856 = vld [vmem:[#allocation5 + $0x10] sm:$0xf]
    %v857 = vld [vmem:[#allocation5 + $0x14] sm:$0xf]
    %v858 = vld [vmem:[#allocation5 + $0x18] sm:$0xf]
    %v859 = vld [vmem:[#allocation5 + $0x1c] sm:$0xf]
    %v860 = vld [vmem:[#allocation5 + $0x20] sm:$0xf]
    %v861 = vld [vmem:[#allocation5 + $0x24] sm:$0xf]
    %v862 = vld [vmem:[#allocation5 + $0x28] sm:$0xf]
    %v863 = vld [vmem:[#allocation5 + $0x2c] sm:$0xf]
    %v864 = vld [vmem:[#allocation5 + $0x30] sm:$0xf]
    %v865 = vld [vmem:[#allocation5 + $0x34] sm:$0xf]
    %v866 = vld [vmem:[#allocation5 + $0x38] sm:$0xf]
    %v867 = vld [vmem:[#allocation5 + $0x3c] sm:$0xf]
    %v868 = vld [vmem:[#allocation5 + $0x40] sm:$0xf]
    %v869 = vld [vmem:[#allocation5 + $0x44] sm:$0xf]
    %v870 = vld [vmem:[#allocation5 + $0x48] sm:$0xf]
    %v871 = vld [vmem:[#allocation5 + $0x4c] sm:$0xf]
    %v872 = vld [vmem:[#allocation5 + $0x50] sm:$0xf]
    %v873 = vld [vmem:[#allocation5 + $0x54] sm:$0xf]
    %v874 = vld [vmem:[#allocation5 + $0x58] sm:$0xf]
    %v875 = vld [vmem:[#allocation5 + $0x5c] sm:$0xf]
    %v876 = vld [vmem:[#allocation5 + $0x60] sm:$0xf]
    %v877 = vld [vmem:[#allocation5 + $0x64] sm:$0xf]
    %v878 = vld [vmem:[#allocation5 + $0x68] sm:$0xf]
    %v879 = vld [vmem:[#allocation5 + $0x6c] sm:$0xf]
    %v880 = vld [vmem:[#allocation5 + $0x70] sm:$0xf]
    %v881 = vld [vmem:[#allocation5 + $0x74] sm:$0xf]
    %v882 = vld [vmem:[#allocation5 + $0x78] sm:$0xf]
    %v883 = vld [vmem:[#allocation5 + $0x7c] sm:$0xf]
    %v884 = vld [vmem:[#allocation5 + $0x80] sm:$0xf]
    %v885 = vld [vmem:[#allocation5 + $0x84] sm:$0xf]
    %v886 = vld [vmem:[#allocation5 + $0x88] sm:$0xf]
    %v887 = vld [vmem:[#allocation5 + $0x8c] sm:$0xf]
    %v888 = vld [vmem:[#allocation5 + $0x90] sm:$0xf]
    %v889 = vld [vmem:[#allocation5 + $0x94] sm:$0xf]
    %v890 = vld [vmem:[#allocation5 + $0x98] sm:$0xf]
    %v891 = vld [vmem:[#allocation5 + $0x9c] sm:$0xf]
    %v892 = vld [vmem:[#allocation5 + $0xa0] sm:$0xf]
    %v893 = vld [vmem:[#allocation5 + $0xa4] sm:$0xf]
    %v894 = vld [vmem:[#allocation5 + $0xa8] sm:$0xf]
    %v895 = vld [vmem:[#allocation5 + $0xac] sm:$0xf]
    %v896 = vld [vmem:[#allocation5 + $0xb0] sm:$0xf]
    %v897 = vld [vmem:[#allocation5 + $0xb4] sm:$0xf]
    %v898 = vld [vmem:[#allocation5 + $0xb8] sm:$0xf]
    %v899 = vld [vmem:[#allocation5 + $0xbc] sm:$0xf]
    %v948 = vunpack.c.l.b16 %v852
    %v949 = vunpack.c.l.b16 %v853
    %v950 = vunpack.c.l.b16 %v854
    %v951 = vunpack.c.l.b16 %v855
    %v952 = vunpack.c.l.b16 %v856
    %v953 = vunpack.c.l.b16 %v857
    %v954 = vunpack.c.l.b16 %v858
    %v955 = vunpack.c.l.b16 %v859
    %v956 = vunpack.c.l.b16 %v860
    %v957 = vunpack.c.l.b16 %v861
    %v958 = vunpack.c.l.b16 %v862
    %v959 = vunpack.c.l.b16 %v863
    %v960 = vunpack.c.l.b16 %v864
    %v961 = vunpack.c.l.b16 %v865
    %v962 = vunpack.c.l.b16 %v866
    %v963 = vunpack.c.l.b16 %v867
    %v964 = vunpack.c.l.b16 %v868
    %v965 = vunpack.c.l.b16 %v869
    %v966 = vunpack.c.l.b16 %v870
    %v967 = vunpack.c.l.b16 %v871
    %v968 = vunpack.c.l.b16 %v872
    %v969 = vunpack.c.l.b16 %v873
    %v970 = vunpack.c.l.b16 %v874
    %v971 = vunpack.c.l.b16 %v875
    %v972 = vunpack.c.l.b16 %v876
    %v973 = vunpack.c.l.b16 %v877
    %v974 = vunpack.c.l.b16 %v878
    %v975 = vunpack.c.l.b16 %v879
    %v976 = vunpack.c.l.b16 %v880
    %v977 = vunpack.c.l.b16 %v881
    %v978 = vunpack.c.l.b16 %v882
    %v979 = vunpack.c.l.b16 %v883
    %v980 = vunpack.c.l.b16 %v884
    %v981 = vunpack.c.l.b16 %v885
    %v982 = vunpack.c.l.b16 %v886
    %v983 = vunpack.c.l.b16 %v887
    %v984 = vunpack.c.l.b16 %v888
    %v985 = vunpack.c.l.b16 %v889
    %v986 = vunpack.c.l.b16 %v890
    %v987 = vunpack.c.l.b16 %v891
    %v988 = vunpack.c.l.b16 %v892
    %v989 = vunpack.c.l.b16 %v893
    %v990 = vunpack.c.l.b16 %v894
    %v991 = vunpack.c.l.b16 %v895
    %v992 = vunpack.c.l.b16 %v896
    %v993 = vunpack.c.l.b16 %v897
    %v994 = vunpack.c.l.b16 %v898
    %v995 = vunpack.c.l.b16 %v899
    %v996 = vpack.c.b16 %v949, %v948
    %v997 = vpack.c.b16 %v951, %v950
    %v998 = vpack.c.b16 %v953, %v952
    %v999 = vpack.c.b16 %v955, %v954
    %v1000 = vpack.c.b16 %v957, %v956
    %v1001 = vpack.c.b16 %v959, %v958
    %v1002 = vpack.c.b16 %v961, %v960
    %v1003 = vpack.c.b16 %v963, %v962
    %v1004 = vpack.c.b16 %v965, %v964
    %v1005 = vpack.c.b16 %v967, %v966
    %v1006 = vpack.c.b16 %v969, %v968
    %v1007 = vpack.c.b16 %v971, %v970
    %v1008 = vpack.c.b16 %v973, %v972
    %v1009 = vpack.c.b16 %v975, %v974
    %v1010 = vpack.c.b16 %v977, %v976
    %v1011 = vpack.c.b16 %v979, %v978
    %v1012 = vpack.c.b16 %v981, %v980
    %v1013 = vpack.c.b16 %v983, %v982
    %v1014 = vpack.c.b16 %v985, %v984
    %v1015 = vpack.c.b16 %v987, %v986
    %v1016 = vpack.c.b16 %v989, %v988
    %v1017 = vpack.c.b16 %v991, %v990
    %v1018 = vpack.c.b16 %v993, %v992
    %v1019 = vpack.c.b16 %v995, %v994
    %1044 = vmatprep.subr.bf16.mxu0 0
    %1045 = vmatpush1.bf16.msra.mxu0 %v996
    %1046 = vmatprep.subr.bf16.mxu0 0
    %1047 = vmatpush1.bf16.msra.mxu0 %v997
    %1048 = vmatprep.subr.bf16.mxu0 0
    %1049 = vmatpush1.bf16.msra.mxu0 %v998
    %1050 = vmatprep.subr.bf16.mxu0 0
    %1051 = vmatpush1.bf16.msra.mxu0 %v999
    %1052 = vmatprep.subr.bf16.mxu0 0
    %1053 = vmatpush1.bf16.msra.mxu0 %v1000
    %1054 = vmatprep.subr.bf16.mxu0 0
    %1055 = vmatpush1.bf16.msra.mxu0 %v1001
    %1056 = vmatprep.subr.bf16.mxu0 0
    %1057 = vmatpush1.bf16.msra.mxu0 %v1002
    %1058 = vmatprep.subr.bf16.mxu0 0
    %1059 = vmatpush1.bf16.msra.mxu0 %v1003
    %1060 = vmatprep.subr.bf16.mxu0 0
    %1061 = vmatpush1.bf16.msra.mxu0 %v1004
    %1062 = vmatprep.subr.bf16.mxu0 0
    %1063 = vmatpush1.bf16.msra.mxu0 %v1005
    %1064 = vmatprep.subr.bf16.mxu0 0
    %1065 = vmatpush1.bf16.msra.mxu0 %v1006
    %1066 = vmatprep.subr.bf16.mxu0 0
    %1067 = vmatpush1.bf16.msra.mxu0 %v1007
    %1068 = vmatprep.subr.bf16.mxu0 0
    %1069 = vmatpush1.bf16.msra.mxu0 %v1008
    %1070 = vmatprep.subr.bf16.mxu0 0
    %1071 = vmatpush1.bf16.msra.mxu0 %v1009
    %1072 = vmatprep.subr.bf16.mxu0 0
    %1073 = vmatpush1.bf16.msra.mxu0 %v1010
    %1074 = vmatprep.subr.bf16.mxu0 0
    %1075 = vmatpush1.bf16.msra.mxu0 %v1011
    %1076 = vmatprep.mubr.bf16.mxu0 %v847
    %1077 = vmatmul.mubr.bf16.gmra.mrb[0].mxu0 %v846
    %v1078 = vpop.f32.mrb[0].mxu0
    %v1079 = vadd.f32 0.0, %v1078
    %v1080 = vpop.f32.mrb[0].mxu0
    %v1081 = vpop.f32.mrb[0].mxu0
    %v1082 = vadd.f32 0.0, %v1081
    %v1083 = vpop.f32.mrb[0].mxu0
    %1084 = vmatprep.mubr.bf16.mxu0 %v850
    %1085 = vmatmul.mubr.bf16.gmra.mrb[0].mxu0 %v849
    %v1086 = vpop.f32.mrb[0].mxu0
    %v1087 = vadd.f32 0.0, %v1086
    %v1088 = vpop.f32.mrb[0].mxu0
    %v1089 = vpop.f32.mrb[0].mxu0
    %v1090 = vadd.f32 0.0, %v1089
    %v1091 = vpop.f32.mrb[0].mxu0
    %1092 = vdwg.mxu0
    %1093 = vmatprep.subr.bf16.mxu0 0
    %1094 = vmatpush1.bf16.msra.mxu0 %v1012
    %1095 = vmatprep.subr.bf16.mxu0 0
    %1096 = vmatpush1.bf16.msra.mxu0 %v1013
    %1097 = vmatprep.subr.bf16.mxu0 0
    %1098 = vmatpush1.bf16.msra.mxu0 %v1014
    %1099 = vmatprep.subr.bf16.mxu0 0
    %1100 = vmatpush1.bf16.msra.mxu0 %v1015
    %1101 = vmatprep.subr.bf16.mxu0 0
    %1102 = vmatpush1.bf16.msra.mxu0 %v1016
    %1103 = vmatprep.subr.bf16.mxu0 0
    %1104 = vmatpush1.bf16.msra.mxu0 %v1017
    %1105 = vmatprep.subr.bf16.mxu0 0
    %1106 = vmatpush1.bf16.msra.mxu0 %v1018
    %1107 = vmatprep.subr.bf16.mxu0 0
    %1108 = vmatpush1.bf16.msra.mxu0 %v1019
    %1109 = vmatprep.subr.bf16.mxu0 0
    %1110 = vmatpush1.bf16.msra.mxu0 0
    %1111 = vmatprep.subr.bf16.mxu0 0
    %1112 = vmatpush1.bf16.msra.mxu0 0
    %1113 = vmatprep.subr.bf16.mxu0 0
    %1114 = vmatpush1.bf16.msra.mxu0 0
    %1115 = vmatprep.subr.bf16.mxu0 0
    %1116 = vmatpush1.bf16.msra.mxu0 0
    %1117 = vmatprep.subr.bf16.mxu0 0
    %1118 = vmatpush1.bf16.msra.mxu0 0
    %1119 = vmatprep.subr.bf16.mxu0 0
    %1120 = vmatpush1.bf16.msra.mxu0 0
    %1121 = vmatprep.subr.bf16.mxu0 0
    %1122 = vmatpush1.bf16.msra.mxu0 0
    %1123 = vmatprep.subr.bf16.mxu0 0
    %1124 = vmatpush1.bf16.msra.mxu0 0
    %1125 = vmatprep.mubr.bf16.mxu0 0
    %1126 = vmatmul.mubr.bf16.gmra.mrb[0].mxu0 %v848
    %v1127 = vpop.f32.mrb[0].mxu0
    %v1128 = vadd.f32 %v1079, %v1127
    %v1129 = vpop.f32.mrb[0].mxu0
    %v1130 = vpop.f32.mrb[0].mxu0
    %v1131 = vadd.f32 %v1082, %v1130
    %v1132 = vpop.f32.mrb[0].mxu0
    %1133 = vmatprep.mubr.bf16.mxu0 0
    %1134 = vmatmul.mubr.bf16.gmra.mrb[0].mxu0 %v851
    %v1135 = vpop.f32.mrb[0].mxu0
    %v1136 = vadd.f32 %v1087, %v1135
    %v1137 = vpop.f32.mrb[0].mxu0
    %v1138 = vpop.f32.mrb[0].mxu0
    %v1139 = vadd.f32 %v1090, %v1138
    %v1140 = vpop.f32.mrb[0].mxu0
    %1141 = vdwg.mxu0
    %1142 = vmatprep.subr.mxu0 0.0
    %1143 = vmatpush1.msra.mxu0 %v1128
    %1144 = vmatprep.subr.mxu0 0.0
    %1145 = vmatpush1.msra.mxu0 %v1131
    %1146 = vmatprep.subr.mxu0 0.0
    %1147 = vmatpush1.msra.mxu0 %v1136
    %1148 = vmatprep.subr.mxu0 0.0
    %1149 = vmatpush1.msra.mxu0 %v1139
    %1150 = vmatprep.subr.mxu0 0.0
    %1151 = vmatpush1.msra.mxu0 0.0
    %1152 = vmatprep.subr.mxu0 0.0
    %1153 = vmatpush1.msra.mxu0 0.0
    %1154 = vmatprep.subr.mxu0 0.0
    %1155 = vmatpush1.msra.mxu0 0.0
    %1156 = vmatprep.subr.mxu0 0.0
    %1157 = vmatpush1.msra.mxu0 0.0
    %1158 = vmatprep.subr.mxu0 0.0
    %1159 = vmatpush1.msra.mxu0 0.0
    %1160 = vmatprep.subr.mxu0 0.0
    %1161 = vmatpush1.msra.mxu0 0.0
    %1162 = vmatprep.subr.mxu0 0.0
    %1163 = vmatpush1.msra.mxu0 0.0
    %1164 = vmatprep.subr.mxu0 0.0
    %1165 = vmatpush1.msra.mxu0 0.0
    %1166 = vmatprep.subr.mxu0 0.0
    %1167 = vmatpush1.msra.mxu0 0.0
    %1168 = vmatprep.subr.mxu0 0.0
    %1169 = vmatpush1.msra.mxu0 0.0
    %1170 = vmatprep.subr.mxu0 0.0
    %1171 = vmatpush1.msra.mxu0 0.0
    %1172 = vmatprep.subr.mxu0 0.0
    %1173 = vmatpush1.msra.mxu0 0.0
    %1174 = vmatprep.subr.mxu0 0.0
    %1175 = vmatpush1.msra.mxu0 0.0
    %1176 = vmatprep.subr.mxu0 0.0
    %1177 = vmatpush1.msra.mxu0 0.0
    %1178 = vmatprep.subr.mxu0 0.0
    %1179 = vmatpush1.msra.mxu0 0.0
    %1180 = vmatprep.subr.mxu0 0.0
    %1181 = vmatpush1.msra.mxu0 0.0
    %1182 = vmatprep.subr.mxu0 0.0
    %1183 = vmatpush1.msra.mxu0 0.0
    %1184 = vmatprep.subr.mxu0 0.0
    %1185 = vmatpush1.msra.mxu0 0.0
    %1186 = vmatprep.subr.mxu0 0.0
    %1187 = vmatpush1.msra.mxu0 0.0
    %1188 = vmatprep.subr.mxu0 0.0
    %1189 = vmatpush1.msra.mxu0 0.0
    %1190 = vmatprep.subr.mxu0 0.0
    %1191 = vmatpush1.msra.mxu0 0.0
    %1192 = vmatprep.subr.mxu0 0.0
    %1193 = vmatpush1.msra.mxu0 0.0
    %1194 = vmatprep.subr.mxu0 0.0
    %1195 = vmatpush1.msra.mxu0 0.0
    %1196 = vmatprep.subr.mxu0 0.0
    %1197 = vmatpush1.msra.mxu0 0.0
    %1198 = vmatprep.subr.mxu0 0.0
    %1199 = vmatpush1.msra.mxu0 0.0
    %1200 = vmatprep.subr.mxu0 0.0
    %1201 = vmatpush1.msra.mxu0 0.0
    %1202 = vmatprep.subr.mxu0 0.0
    %1203 = vmatpush1.msra.mxu0 0.0
    %1204 = vmatprep.subr.mxu0 0.0
    %1205 = vmatpush1.msra.mxu0 0.0
    %1206 = vmatprep.mubr.f32.mxu0 0.0
    %1207 = vmatmul.mubr.f32.gmra.mrb[0].mxu0 %v453
    %v1208 = vpop.f32.mrb[0].mxu0
    %v1209 = vadd.f32 0.0, %v1208
    %v1210 = vpop.f32.mrb[0].mxu0
    %1211 = vdwg.mxu0
    %v1212 = vmul.f32 %v1128, %v1128
    %v1213 = vmul.f32 %v1131, %v1131
    %v1214 = vmul.f32 %v1136, %v1136
    %v1215 = vmul.f32 %v1139, %v1139
    %1216 = vmatprep.subr.mxu0 0.0
    %1217 = vmatpush1.msra.mxu0 %v1212
    %1218 = vmatprep.subr.mxu0 0.0
    %1219 = vmatpush1.msra.mxu0 %v1213
    %1220 = vmatprep.subr.mxu0 0.0
    %1221 = vmatpush1.msra.mxu0 %v1214
    %1222 = vmatprep.subr.mxu0 0.0
    %1223 = vmatpush1.msra.mxu0 %v1215
    %1224 = vmatprep.subr.mxu0 0.0
    %1225 = vmatpush1.msra.mxu0 0.0
    %1226 = vmatprep.subr.mxu0 0.0
    %1227 = vmatpush1.msra.mxu0 0.0
    %1228 = vmatprep.subr.mxu0 0.0
    %1229 = vmatpush1.msra.mxu0 0.0
    %1230 = vmatprep.subr.mxu0 0.0
    %1231 = vmatpush1.msra.mxu0 0.0
    %1232 = vmatprep.subr.mxu0 0.0
    %1233 = vmatpush1.msra.mxu0 0.0
    %1234 = vmatprep.subr.mxu0 0.0
    %1235 = vmatpush1.msra.mxu0 0.0
    %1236 = vmatprep.subr.mxu0 0.0
    %1237 = vmatpush1.msra.mxu0 0.0
    %1238 = vmatprep.subr.mxu0 0.0
    %1239 = vmatpush1.msra.mxu0 0.0
    %1240 = vmatprep.subr.mxu0 0.0
    %1241 = vmatpush1.msra.mxu0 0.0
    %1242 = vmatprep.subr.mxu0 0.0
    %1243 = vmatpush1.msra.mxu0 0.0
    %1244 = vmatprep.subr.mxu0 0.0
    %1245 = vmatpush1.msra.mxu0 0.0
    %1246 = vmatprep.subr.mxu0 0.0
    %1247 = vmatpush1.msra.mxu0 0.0
    %1248 = vmatprep.subr.mxu0 0.0
    %1249 = vmatpush1.msra.mxu0 0.0
    %1250 = vmatprep.subr.mxu0 0.0
    %1251 = vmatpush1.msra.mxu0 0.0
    %1252 = vmatprep.subr.mxu0 0.0
    %1253 = vmatpush1.msra.mxu0 0.0
    %1254 = vmatprep.subr.mxu0 0.0
    %1255 = vmatpush1.msra.mxu0 0.0
    %1256 = vmatprep.subr.mxu0 0.0
    %1257 = vmatpush1.msra.mxu0 0.0
    %1258 = vmatprep.subr.mxu0 0.0
    %1259 = vmatpush1.msra.mxu0 0.0
    %1260 = vmatprep.subr.mxu0 0.0
    %1261 = vmatpush1.msra.mxu0 0.0
    %1262 = vmatprep.subr.mxu0 0.0
    %1263 = vmatpush1.msra.mxu0 0.0
    %1264 = vmatprep.subr.mxu0 0.0
    %1265 = vmatpush1.msra.mxu0 0.0
    %1266 = vmatprep.subr.mxu0 0.0
    %1267 = vmatpush1.msra.mxu0 0.0
    %1268 = vmatprep.subr.mxu0 0.0
    %1269 = vmatpush1.msra.mxu0 0.0
    %1270 = vmatprep.subr.mxu0 0.0
    %1271 = vmatpush1.msra.mxu0 0.0
    %1272 = vmatprep.subr.mxu0 0.0
    %1273 = vmatpush1.msra.mxu0 0.0
    %1274 = vmatprep.subr.mxu0 0.0
    %1275 = vmatpush1.msra.mxu0 0.0
    %1276 = vmatprep.subr.mxu0 0.0
    %1277 = vmatpush1.msra.mxu0 0.0
    %1278 = vmatprep.subr.mxu0 0.0
    %1279 = vmatpush1.msra.mxu0 0.0
    %1280 = vmatprep.mubr.f32.mxu0 0.0
    %1281 = vmatmul.mubr.f32.gmra.mrb[0].mxu0 %v453
    %v1282 = vpop.f32.mrb[0].mxu0
    %v1283 = vadd.f32 0.0, %v1282
    %v1284 = vpop.f32.mrb[0].mxu0
    %1285 = vdwg.mxu0
    %v1287 = vrot.slane %v1283, 7
    %v1289 = vsel %vm602, %v1209, %v1287
    %1290 = vmatprep.subr.mxu0 0.0
    %1291 = vmatpush1.msra.mxu0 %v604
    %1292 = vmatprep.subr.mxu0 0.0
    %1293 = vmatpush1.msra.mxu0 %v605
    %1294 = vmatprep.subr.mxu0 0.0
    %1295 = vmatpush1.msra.mxu0 %v606
    %1296 = vmatprep.subr.mxu0 0.0
    %1297 = vmatpush1.msra.mxu0 %v607
    %1298 = vmatprep.subr.mxu0 0.0
    %1299 = vmatpush1.msra.mxu0 %v608
    %1300 = vmatprep.subr.mxu0 0.0
    %1301 = vmatpush1.msra.mxu0 %v609
    %1302 = vmatprep.subr.mxu0 0.0
    %1303 = vmatpush1.msra.mxu0 %v610
    %1304 = vmatprep.subr.mxu0 0.0
    %1305 = vmatpush1.msra.mxu0 %v611
    %1306 = vmatprep.subr.mxu0 0.0
    %1307 = vmatpush1.msra.mxu0 %v612
    %1308 = vmatprep.subr.mxu0 0.0
    %1309 = vmatpush1.msra.mxu0 %v613
    %1310 = vmatprep.subr.mxu0 0.0
    %1311 = vmatpush1.msra.mxu0 %v614
    %1312 = vmatprep.subr.mxu0 0.0
    %1313 = vmatpush1.msra.mxu0 %v615
    %1314 = vmatprep.subr.mxu0 0.0
    %1315 = vmatpush1.msra.mxu0 %v616
    %1316 = vmatprep.subr.mxu0 0.0
    %1317 = vmatpush1.msra.mxu0 %v617
    %1318 = vmatprep.subr.mxu0 0.0
    %1319 = vmatpush1.msra.mxu0 %v618
    %1320 = vmatprep.subr.mxu0 0.0
    %1321 = vmatpush1.msra.mxu0 %v619
    %1322 = vmatprep.subr.mxu0 0.0
    %1323 = vmatpush1.msra.mxu0 0.0
    %1324 = vmatprep.subr.mxu0 0.0
    %1325 = vmatpush1.msra.mxu0 0.0
    %1326 = vmatprep.subr.mxu0 0.0
    %1327 = vmatpush1.msra.mxu0 0.0
    %1328 = vmatprep.subr.mxu0 0.0
    %1329 = vmatpush1.msra.mxu0 0.0
    %1330 = vmatprep.subr.mxu0 0.0
    %1331 = vmatpush1.msra.mxu0 0.0
    %1332 = vmatprep.subr.mxu0 0.0
    %1333 = vmatpush1.msra.mxu0 0.0
    %1334 = vmatprep.subr.mxu0 0.0
    %1335 = vmatpush1.msra.mxu0 0.0
    %1336 = vmatprep.subr.mxu0 0.0
    %1337 = vmatpush1.msra.mxu0 0.0
    %1338 = vmatprep.subr.mxu0 0.0
    %1339 = vmatpush1.msra.mxu0 0.0
    %1340 = vmatprep.subr.mxu0 0.0
    %1341 = vmatpush1.msra.mxu0 0.0
    %1342 = vmatprep.subr.mxu0 0.0
    %1343 = vmatpush1.msra.mxu0 0.0
    %1344 = vmatprep.subr.mxu0 0.0
    %1345 = vmatpush1.msra.mxu0 0.0
    %1346 = vmatprep.subr.mxu0 0.0
    %1347 = vmatpush1.msra.mxu0 0.0
    %1348 = vmatprep.subr.mxu0 0.0
    %1349 = vmatpush1.msra.mxu0 0.0
    %1350 = vmatprep.subr.mxu0 0.0
    %1351 = vmatpush1.msra.mxu0 0.0
    %1352 = vmatprep.subr.mxu0 0.0
    %1353 = vmatpush1.msra.mxu0 0.0
    %1354 = vmatprep.mubr.f32.mxu0 0.0
    %1355 = vmatmul.mubr.f32.gmra.mrb[0].mxu0 %v1289
    %v1356 = vpop.f32.mrb[0].mxu0
    %v1357 = vadd.f32 0.0, %v1356
    %v1358 = vpop.f32.mrb[0].mxu0
    %1359 = vdwg.mxu0
    %v1360 = vmul.f32 %v1357, 0.001953125
    %v1361 = vmul.f32 %v1360, %v1360
    %v1363 = vrot.slane %v1361, 7
    %v1365 = vsub.f32 %v1360, %v1363
    %v1366 = vadd.f32 %v1365, 1e-05
    %v1367 = vrsqrt.pop %v1366
    %v1370 = vunpack.c.l.s4 1966171168
    %v1371 = vunpack.c.0.s8 %v1370
    %v1372 = vlaneseq
    %v1373 = vshrl.u32 %v1372, 7
    %v1374 = vsub.s32 %v1371, %v1373
    %v1375 = vrot.slane %v1367, %v1374
    %v1376 = vcombine.high %v1375, %v1375
    %v1378 = vunpack.c.l.s4 1966171168
    %v1379 = vunpack.c.0.s8 %v1378
    %v1380 = vlaneseq
    %v1381 = vshrl.u32 %v1380, 7
    %v1382 = vsub.s32 %v1379, %v1381
    %v1383 = vrot.slane %v1376, %v1382
    %v1385 = vmul.f32 %v820, %v1383
    %v1386 = vmul.f32 %v1360, %v1385
    %v1387 = vsub.f32 %v821, %v1386
    %v1389 = vlaneseq
    %v1390 = vshrl.u32 %v1389, 7
    %v1391 = vsub.s32 0, %v1390
    %v1392 = vrot.slane %v1387, %v1391
    %v1394 = vsel %vm602, %v1385, %v1392
    %v1396 = vsel %vm726, %v1394, 0
    %1398 = vmatprep.subr.mxu0 0.0
    %1399 = vmatpush1.msra.mxu0 %v725
    %1400 = vmatprep.subr.mxu0 0.0
    %1401 = vmatpush1.msra.mxu0 0.0
    %1402 = vmatprep.subr.mxu0 0.0
    %1403 = vmatpush1.msra.mxu0 0.0
    %1404 = vmatprep.subr.mxu0 0.0
    %1405 = vmatpush1.msra.mxu0 0.0
    %1406 = vmatprep.subr.mxu0 0.0
    %1407 = vmatpush1.msra.mxu0 0.0
    %1408 = vmatprep.subr.mxu0 0.0
    %1409 = vmatpush1.msra.mxu0 0.0
    %1410 = vmatprep.subr.mxu0 0.0
    %1411 = vmatpush1.msra.mxu0 0.0
    %1412 = vmatprep.subr.mxu0 0.0
    %1413 = vmatpush1.msra.mxu0 0.0
    %1414 = vmatprep.subr.mxu0 0.0
    %1415 = vmatpush1.msra.mxu0 0.0
    %1416 = vmatprep.subr.mxu0 0.0
    %1417 = vmatpush1.msra.mxu0 0.0
    %1418 = vmatprep.subr.mxu0 0.0
    %1419 = vmatpush1.msra.mxu0 0.0
    %1420 = vmatprep.subr.mxu0 0.0
    %1421 = vmatpush1.msra.mxu0 0.0
    %1422 = vmatprep.subr.mxu0 0.0
    %1423 = vmatpush1.msra.mxu0 0.0
    %1424 = vmatprep.subr.mxu0 0.0
    %1425 = vmatpush1.msra.mxu0 0.0
    %1426 = vmatprep.subr.mxu0 0.0
    %1427 = vmatpush1.msra.mxu0 0.0
    %1428 = vmatprep.subr.mxu0 0.0
    %1429 = vmatpush1.msra.mxu0 0.0
    %1430 = vmatprep.subr.mxu0 0.0
    %1431 = vmatpush1.msra.mxu0 0.0
    %1432 = vmatprep.subr.mxu0 0.0
    %1433 = vmatpush1.msra.mxu0 0.0
    %1434 = vmatprep.subr.mxu0 0.0
    %1435 = vmatpush1.msra.mxu0 0.0
    %1436 = vmatprep.subr.mxu0 0.0
    %1437 = vmatpush1.msra.mxu0 0.0
    %1438 = vmatprep.subr.mxu0 0.0
    %1439 = vmatpush1.msra.mxu0 0.0
    %1440 = vmatprep.subr.mxu0 0.0
    %1441 = vmatpush1.msra.mxu0 0.0
    %1442 = vmatprep.subr.mxu0 0.0
    %1443 = vmatpush1.msra.mxu0 0.0
    %1444 = vmatprep.subr.mxu0 0.0
    %1445 = vmatpush1.msra.mxu0 0.0
    %1446 = vmatprep.subr.mxu0 0.0
    %1447 = vmatpush1.msra.mxu0 0.0
    %1448 = vmatprep.subr.mxu0 0.0
    %1449 = vmatpush1.msra.mxu0 0.0
    %1450 = vmatprep.subr.mxu0 0.0
    %1451 = vmatpush1.msra.mxu0 0.0
    %1452 = vmatprep.subr.mxu0 0.0
    %1453 = vmatpush1.msra.mxu0 0.0
    %1454 = vmatprep.subr.mxu0 0.0
    %1455 = vmatpush1.msra.mxu0 0.0
    %1456 = vmatprep.subr.mxu0 0.0
    %1457 = vmatpush1.msra.mxu0 0.0
    %1458 = vmatprep.subr.mxu0 0.0
    %1459 = vmatpush1.msra.mxu0 0.0
    %1460 = vmatprep.subr.mxu0 0.0
    %1461 = vmatpush1.msra.mxu0 0.0
    %1462 = vmatprep.mubr.f32.mxu0 0.0
    %1463 = vmatmul.mubr.f32.gmra.mrb[0].mxu0 %v1396
    %v1464 = vpop.f32.mrb[0].mxu0
    %v1465 = vadd.f32 0.0, %v1464
    %v1466 = vpop.f32.mrb[0].mxu0
    %1467 = vdwg.mxu0
    %v1468 = vlaneseq
    %v1469 = vshrl.u32 %v1468, 7
    %v1470 = vsub.s32 0, %v1469
    %v1471 = vrot.slane %v1465, %v1470
    %v1472 = vmul.f32 %v1128, %v1471
    %v1473 = vmul.f32 %v1131, %v1471
    %v1474 = vmul.f32 %v1136, %v1471
    %v1475 = vmul.f32 %v1139, %v1471
    %v1476 = vlaneseq
    %v1477 = vshrl.u32 %v1476, 7
    %v1478 = vsub.s32 1, %v1477
    %v1479 = vrot.slane %v1465, %v1478
    %v1480 = vadd.f32 %v1472, %v1479
    %v1481 = vadd.f32 %v1473, %v1479
    %v1482 = vadd.f32 %v1474, %v1479
    %v1483 = vadd.f32 %v1475, %v1479
    %v1484 = vadd.f32 %v1480, %v62
    %v1485 = vadd.f32 %v1481, %v63
    %v1486 = vadd.f32 %v1482, %v64
    %v1487 = vadd.f32 %v1483, %v65
    %v1488 = vmax.f32 %v1484, 0.0
    %v1489 = vmax.f32 %v1485, 0.0
    %v1490 = vmax.f32 %v1486, 0.0
    %v1491 = vmax.f32 %v1487, 0.0
    %1492 = vst [vmem:[#allocation7] sm:$0xff] %v1488
    %1493 = vst [vmem:[#allocation7 + $0x8] sm:$0xff] %v1489
    %1494 = vst [vmem:[#allocation7 + $0x10] sm:$0xff] %v1490
    %1495 = vst [vmem:[#allocation7 + $0x18] sm:$0xff] %v1491
    // Predicated region
    $region46: #{tpu_custom_call.1} parent=1 // pred_check
      _
    $region47: #{tpu_custom_call.1} parent=1 // pred_check_branch
      %1497 = sbr.rel (0) target = $region49
    $region48: #{tpu_custom_call.1} parent=1 // pred_region
      %s1499 = ssub.s32 512, 512
      %1500 = vsyncadd [#allocation4], %s1499
      %s1501 = sshll.u32 [#allocation7], 4
      %s1502 = int_to_ptr.vmem [resolvable:$true] %s1501
      %1507 = dma.vmem_to_hbm [thread:$0]  %s1502, 512, %s9, [#allocation4], 128, 128, 8
    $region49: #{tpu_custom_call.1} parent=1 // pred_fallthru
      _
    // Predicated region
    $region50: #{tpu_custom_call.1} parent=1 // pred_check
      _
    $region51: #{tpu_custom_call.1} parent=1 // pred_check_branch
      %1509 = sbr.rel (0) target = $region53
    $region52: #{tpu_custom_call.1} parent=1 // pred_region
      %1510 = dma.done [#allocation4], 512
    $region53: #{tpu_custom_call.1} parent=1 // pred_fallthru
      _
    %1511 = vsyncpa [#allocation3], 1
    %1512 = vsyncpa [#allocation6], 1
    %1513 = vsyncpa [#allocation4], 1

</llo_original>
